<compile_context>
chip_gen: v7x
topology: tpu7x:2x2x1
jax: 0.10.0
libtpu: 0.0.40
codegen_flags: <defaults>
</compile_context>

<pallas_src>
import functools

import jax
import jax.numpy as jnp
from jax.experimental import pallas as pl
from jax.experimental.pallas import tpu as pltpu


def _make_decomp_kernel(kernel_size: int, seq_len: int, channels: int):
    K = kernel_size
    L = seq_len
    C = channels
    pad = (K - 1) // 2
    W = L * C

    def shift_zero(v, s):
        # out[:, l] = v[:, l + s] if 0 <= l + s < W else 0   (s is a static int)
        rows = v.shape[0]
        if s == 0:
            return v
        if s > 0:
            return jnp.concatenate(
                [v[:, s:], jnp.zeros((rows, s), v.dtype)], axis=1)
        s = -s
        return jnp.concatenate(
            [jnp.zeros((rows, s), v.dtype), v[:, :W - s]], axis=1)

    def kernel(x_ref, res_ref, mean_ref):
        x = x_ref[...].astype(jnp.float32)          # (rows, W), cast exactly once
        inv_k = jnp.float32(1.0 / K)

        # total[:, t*C + c] = sum over the in-range part of the window
        #                     sum_{j<K, 0 <= t-pad+j < L} x[:, (t-pad+j)*C + c]
        # for every t >= pad (the left-edge strip is fixed up below).  Built by
        # log-depth doubling of zero-extended lane shifts; each set bit of K is
        # folded immediately so only `cur` and `total` stay live.
        total = None
        cur = x
        w, off = 1, 0
        while True:
            if K & w:
                term = shift_zero(cur, (off - pad) * C)
                total = term if total is None else total + term
                off += w
            if 2 * w > K:
                break
            cur = cur + shift_zero(cur, w * C)
            w *= 2

        mean = total * inv_k
        res_ref[...] = (x - mean).astype(res_ref.dtype)
        mean_ref[...] = mean.astype(mean_ref.dtype)

        if pad == 0:
            return

        # Edge fix-up (replicate padding): only the first / last `pad` time steps.
        x0 = x[:, 0:C]                               # x at t = 0
        xl = x[:, W - C:W]                           # x at t = L-1

        # Left edge: S(t) = sum_{u<=t+pad} x[u] + (pad - t) * x[0]
        run = x0
        for u in range(1, pad + 1):
            run = run + x[:, u * C:(u + 1) * C]
        for t in range(pad):
            if t > 0:
                run = run + x[:, (t + pad) * C:(t + pad + 1) * C]
            m = (run + jnp.float32(pad - t) * x0) * inv_k
            mean_ref[:, t * C:(t + 1) * C] = m.astype(mean_ref.dtype)
            res_ref[:, t * C:(t + 1) * C] = (
                x[:, t * C:(t + 1) * C] - m).astype(res_ref.dtype)

        # Right edge: S(t) = total(t) + (t - (L-1-pad)) * x[L-1]
        for t in range(L - pad, L):
            cnt = jnp.float32(t - (L - 1 - pad))
            m = (total[:, t * C:(t + 1) * C] + cnt * xl) * inv_k
            mean_ref[:, t * C:(t + 1) * C] = m.astype(mean_ref.dtype)
            res_ref[:, t * C:(t + 1) * C] = (
                x[:, t * C:(t + 1) * C] - m).astype(res_ref.dtype)

    return kernel


@functools.partial(jax.jit, static_argnums=(1, 2))
def series_decomp(x: jax.Array, kernel_size: int, block_rows=None):
    """x: (B, L, C) -> (res, moving_mean), both (B, L, C)."""
    K = kernel_size
    assert K % 2 == 1, "even kernel_size changes output length in torch"
    B, L, C = x.shape
    assert 1 <= K <= L
    W = L * C

    # Free, row-major layout change: time*channels on the lane axis (no transpose).
    x2 = x.reshape(B, W)

    itemsize = jnp.dtype(x.dtype).itemsize
    sub = {4: 8, 2: 16, 1: 32}.get(itemsize, 8)      # dtype sublane tile

    # VMEM per block row: (1 in + 2 out) double-buffered I/O + ~6 live f32 temps.
    per_row = W * (6 * itemsize + 6 * 4)
    budget = 12 * 1024 * 1024                        # fits v5e's 16 MiB default

    if block_rows is not None:
        tr = block_rows
    elif B * per_row <= budget:
        tr = B
        # Give v7x's two TensorCores >= 2 grid steps when it stays evenly tiled.
        if B % 2 == 0 and (B // 2) % sub == 0:
            tr = B // 2
    else:
        tr = max(sub, (budget // per_row) // sub * sub)
    tr = max(1, min(tr, B))

    if tr < B:
        assert tr % sub == 0, "row block must be a multiple of the sublane tile"
    grid = (pl.cdiv(B, tr),)

    res2, mean2 = pl.pallas_call(
        _make_decomp_kernel(K, L, C),
        out_shape=(
            jax.ShapeDtypeStruct((B, W), x.dtype),
            jax.ShapeDtypeStruct((B, W), x.dtype),
        ),
        grid=grid,
        in_specs=[pl.BlockSpec((tr, W), lambda i: (i, 0))],
        out_specs=(
            pl.BlockSpec((tr, W), lambda i: (i, 0)),
            pl.BlockSpec((tr, W), lambda i: (i, 0)),
        ),
        compiler_params=pltpu.CompilerParams(
            dimension_semantics=("parallel",),
            vmem_limit_bytes=32 * 1024 * 1024,
        ),
    )(x2)

    return res2.reshape(B, L, C), mean2.reshape(B, L, C)


def _reference(x, kernel_size):
    """Pure-JAX reference mirroring the PyTorch moving_avg/series_decomp."""
    pad = (kernel_size - 1) // 2
    front = jnp.repeat(x[:, :1, :], pad, axis=1)
    end = jnp.repeat(x[:, -1:, :], pad, axis=1)
    xp = jnp.concatenate([front, x, end], axis=1)
    L = x.shape[1]
    windows = jnp.stack([xp[:, j:j + L, :] for j in range(kernel_size)], axis=0)
    mean = jnp.mean(windows, axis=0)
    return x - mean, mean


def _check(x, kernel_size, block_rows=None, atol=1e-5, rtol=1e-5):
    res, mean = series_decomp(x, kernel_size, block_rows)
    res, mean = jax.block_until_ready((res, mean))
    res_ref, mean_ref = _reference(x.astype(jnp.float32), kernel_size)
    assert res.shape == x.shape and mean.shape == x.shape
    assert jnp.allclose(res.astype(jnp.float32), res_ref, atol=atol, rtol=rtol)
    assert jnp.allclose(mean.astype(jnp.float32), mean_ref, atol=atol, rtol=rtol)


if __name__ == "__main__":
    key = jax.random.PRNGKey(0)
    k1, k2, k3, k4 = jax.random.split(key, 4)

    # DLinear-style shapes: seq*channels (1024) on the lane axis, one full-dim block.
    x1 = jax.random.normal(k1, (2, 128, 8), dtype=jnp.float32)
    _check(x1, 25)
    _check(x1, 1)     # degenerate kernel: mean == x, res == 0

    # Odd B / C, lane width 96*7 = 672 (not a multiple of 128), full-dim block.
    x2 = jax.random.normal(k2, (3, 96, 7), dtype=jnp.float32)
    _check(x2, 13)

    # bf16 + explicit multi-step row grid (2 steps of 16 rows = bf16 sublane tile).
    x3 = jax.random.normal(k3, (32, 64, 4), dtype=jnp.float32).astype(jnp.bfloat16)
    _check(x3, 9, block_rows=16, atol=3e-2, rtol=3e-2)

    # f32, exercises the automatic even split into 2 parallel grid steps (v7x path).
    x4 = jax.random.normal(k4, (16, 32, 4), dtype=jnp.float32)
    _check(x4, 7)

    print("KERNEL_OK")
</pallas_src>

<mosaic_0001>
module attributes {stable_mosaic.version = 11 : i64} {
  func.func @kernel(%arg0: i32, %arg1: memref<2x1024xf32, #tpu.memory_space<vmem>>, %arg2: memref<2x1024xf32, #tpu.memory_space<vmem>>, %arg3: memref<2x1024xf32, #tpu.memory_space<vmem>>) attributes {dimension_semantics = [#tpu.dimension_semantics<parallel>], iteration_bounds = array<i64: 1>, scalar_prefetch = 0 : i64, scratch_operands = 0 : i64, tpu.core_type = #tpu.core_type<tc>, window_params = [{transform_indices = @transform_0, window_bounds = array<i64: 2, 1024>}, {transform_indices = @transform_1, window_bounds = array<i64: 2, 1024>}, {transform_indices = @transform_2, window_bounds = array<i64: 2, 1024>}]} {
    %c0 = arith.constant 0 : index
    %c0_0 = arith.constant 0 : index
    %0 = vector.load %arg1[%c0, %c0_0] : memref<2x1024xf32, #tpu.memory_space<vmem>>, vector<2x1024xf32>
    %cst = arith.constant 0.000000e+00 : f32
    %1 = vector.broadcast %cst : f32 to vector<2x96xf32>
    %2 = vector.extract_strided_slice %0 {offsets = [0, 0], sizes = [2, 928], strides = [1, 1]} : vector<2x1024xf32> to vector<2x928xf32>
    %3 = tpu.concatenate %1, %2 in 1 : vector<2x96xf32>, vector<2x928xf32> -> vector<2x1024xf32>
    %4 = vector.extract_strided_slice %0 {offsets = [0, 8], sizes = [2, 1016], strides = [1, 1]} : vector<2x1024xf32> to vector<2x1016xf32>
    %cst_1 = arith.constant 0.000000e+00 : f32
    %5 = vector.broadcast %cst_1 : f32 to vector<2x8xf32>
    %6 = tpu.concatenate %4, %5 in 1 : vector<2x1016xf32>, vector<2x8xf32> -> vector<2x1024xf32>
    %7 = arith.addf %0, %6 : vector<2x1024xf32>
    %8 = vector.extract_strided_slice %7 {offsets = [0, 16], sizes = [2, 1008], strides = [1, 1]} : vector<2x1024xf32> to vector<2x1008xf32>
    %cst_2 = arith.constant 0.000000e+00 : f32
    %9 = vector.broadcast %cst_2 : f32 to vector<2x16xf32>
    %10 = tpu.concatenate %8, %9 in 1 : vector<2x1008xf32>, vector<2x16xf32> -> vector<2x1024xf32>
    %11 = arith.addf %7, %10 : vector<2x1024xf32>
    %12 = vector.extract_strided_slice %11 {offsets = [0, 32], sizes = [2, 992], strides = [1, 1]} : vector<2x1024xf32> to vector<2x992xf32>
    %cst_3 = arith.constant 0.000000e+00 : f32
    %13 = vector.broadcast %cst_3 : f32 to vector<2x32xf32>
    %14 = tpu.concatenate %12, %13 in 1 : vector<2x992xf32>, vector<2x32xf32> -> vector<2x1024xf32>
    %15 = arith.addf %11, %14 : vector<2x1024xf32>
    %cst_4 = arith.constant 0.000000e+00 : f32
    %16 = vector.broadcast %cst_4 : f32 to vector<2x88xf32>
    %17 = vector.extract_strided_slice %15 {offsets = [0, 0], sizes = [2, 936], strides = [1, 1]} : vector<2x1024xf32> to vector<2x936xf32>
    %18 = tpu.concatenate %16, %17 in 1 : vector<2x88xf32>, vector<2x936xf32> -> vector<2x1024xf32>
    %19 = arith.addf %3, %18 : vector<2x1024xf32>
    %20 = vector.extract_strided_slice %15 {offsets = [0, 64], sizes = [2, 960], strides = [1, 1]} : vector<2x1024xf32> to vector<2x960xf32>
    %cst_5 = arith.constant 0.000000e+00 : f32
    %21 = vector.broadcast %cst_5 : f32 to vector<2x64xf32>
    %22 = tpu.concatenate %20, %21 in 1 : vector<2x960xf32>, vector<2x64xf32> -> vector<2x1024xf32>
    %23 = arith.addf %15, %22 : vector<2x1024xf32>
    %cst_6 = arith.constant 0.000000e+00 : f32
    %24 = vector.broadcast %cst_6 : f32 to vector<2x24xf32>
    %25 = vector.extract_strided_slice %23 {offsets = [0, 0], sizes = [2, 1000], strides = [1, 1]} : vector<2x1024xf32> to vector<2x1000xf32>
    %26 = tpu.concatenate %24, %25 in 1 : vector<2x24xf32>, vector<2x1000xf32> -> vector<2x1024xf32>
    %27 = arith.addf %19, %26 : vector<2x1024xf32>
    %cst_7 = arith.constant 4.000000e-02 : f32
    %28 = vector.broadcast %cst_7 : f32 to vector<2x1024xf32>
    %29 = arith.mulf %27, %28 : vector<2x1024xf32>
    %30 = arith.subf %0, %29 : vector<2x1024xf32>
    %c0_8 = arith.constant 0 : index
    %c0_9 = arith.constant 0 : index
    %31 = vector.load %arg2[%c0_8, %c0_9] : memref<2x1024xf32, #tpu.memory_space<vmem>>, vector<2x1024xf32>
    tpu.vector_store %arg2[%c0_8, %c0_9], %30 {strides = array<i32>} : memref<2x1024xf32, #tpu.memory_space<vmem>>, vector<2x1024xf32>,
    %c0_10 = arith.constant 0 : index
    %c0_11 = arith.constant 0 : index
    %32 = vector.load %arg3[%c0_10, %c0_11] : memref<2x1024xf32, #tpu.memory_space<vmem>>, vector<2x1024xf32>
    tpu.vector_store %arg3[%c0_10, %c0_11], %29 {strides = array<i32>} : memref<2x1024xf32, #tpu.memory_space<vmem>>, vector<2x1024xf32>,
    %33 = vector.extract_strided_slice %0 {offsets = [0, 0], sizes = [2, 8], strides = [1, 1]} : vector<2x1024xf32> to vector<2x8xf32>
    %34 = vector.extract_strided_slice %0 {offsets = [0, 1016], sizes = [2, 8], strides = [1, 1]} : vector<2x1024xf32> to vector<2x8xf32>
    %35 = vector.extract_strided_slice %0 {offsets = [0, 8], sizes = [2, 8], strides = [1, 1]} : vector<2x1024xf32> to vector<2x8xf32>
    %36 = arith.addf %33, %35 : vector<2x8xf32>
    %37 = vector.extract_strided_slice %0 {offsets = [0, 16], sizes = [2, 8], strides = [1, 1]} : vector<2x1024xf32> to vector<2x8xf32>
    %38 = arith.addf %36, %37 : vector<2x8xf32>
    %39 = vector.extract_strided_slice %0 {offsets = [0, 24], sizes = [2, 8], strides = [1, 1]} : vector<2x1024xf32> to vector<2x8xf32>
    %40 = arith.addf %38, %39 : vector<2x8xf32>
    %41 = vector.extract_strided_slice %0 {offsets = [0, 32], sizes = [2, 8], strides = [1, 1]} : vector<2x1024xf32> to vector<2x8xf32>
    %42 = arith.addf %40, %41 : vector<2x8xf32>
    %43 = vector.extract_strided_slice %0 {offsets = [0, 40], sizes = [2, 8], strides = [1, 1]} : vector<2x1024xf32> to vector<2x8xf32>
    %44 = arith.addf %42, %43 : vector<2x8xf32>
    %45 = vector.extract_strided_slice %0 {offsets = [0, 48], sizes = [2, 8], strides = [1, 1]} : vector<2x1024xf32> to vector<2x8xf32>
    %46 = arith.addf %44, %45 : vector<2x8xf32>
    %47 = vector.extract_strided_slice %0 {offsets = [0, 56], sizes = [2, 8], strides = [1, 1]} : vector<2x1024xf32> to vector<2x8xf32>
    %48 = arith.addf %46, %47 : vector<2x8xf32>
    %49 = vector.extract_strided_slice %0 {offsets = [0, 64], sizes = [2, 8], strides = [1, 1]} : vector<2x1024xf32> to vector<2x8xf32>
    %50 = arith.addf %48, %49 : vector<2x8xf32>
    %51 = vector.extract_strided_slice %0 {offsets = [0, 72], sizes = [2, 8], strides = [1, 1]} : vector<2x1024xf32> to vector<2x8xf32>
    %52 = arith.addf %50, %51 : vector<2x8xf32>
    %53 = vector.extract_strided_slice %0 {offsets = [0, 80], sizes = [2, 8], strides = [1, 1]} : vector<2x1024xf32> to vector<2x8xf32>
    %54 = arith.addf %52, %53 : vector<2x8xf32>
    %55 = vector.extract_strided_slice %0 {offsets = [0, 88], sizes = [2, 8], strides = [1, 1]} : vector<2x1024xf32> to vector<2x8xf32>
    %56 = arith.addf %54, %55 : vector<2x8xf32>
    %57 = vector.extract_strided_slice %0 {offsets = [0, 96], sizes = [2, 8], strides = [1, 1]} : vector<2x1024xf32> to vector<2x8xf32>
    %58 = arith.addf %56, %57 : vector<2x8xf32>
    %cst_12 = arith.constant 1.200000e+01 : f32
    %59 = vector.broadcast %cst_12 : f32 to vector<2x8xf32>
    %60 = arith.mulf %59, %33 : vector<2x8xf32>
    %61 = arith.addf %58, %60 : vector<2x8xf32>
    %cst_13 = arith.constant 4.000000e-02 : f32
    %62 = vector.broadcast %cst_13 : f32 to vector<2x8xf32>
    %63 = arith.mulf %61, %62 : vector<2x8xf32>
    %c0_14 = arith.constant 0 : index
    %c0_15 = arith.constant 0 : index
    %64 = vector.load %arg3[%c0_14, %c0_15] : memref<2x1024xf32, #tpu.memory_space<vmem>>, vector<2x8xf32>
    tpu.vector_store %arg3[%c0_14, %c0_15], %63 {strides = array<i32>} : memref<2x1024xf32, #tpu.memory_space<vmem>>, vector<2x8xf32>,
    %65 = vector.extract_strided_slice %0 {offsets = [0, 0], sizes = [2, 8], strides = [1, 1]} : vector<2x1024xf32> to vector<2x8xf32>
    %66 = arith.subf %65, %63 : vector<2x8xf32>
    %c0_16 = arith.constant 0 : index
    %c0_17 = arith.constant 0 : index
    %67 = vector.load %arg2[%c0_16, %c0_17] : memref<2x1024xf32, #tpu.memory_space<vmem>>, vector<2x8xf32>
    tpu.vector_store %arg2[%c0_16, %c0_17], %66 {strides = array<i32>} : memref<2x1024xf32, #tpu.memory_space<vmem>>, vector<2x8xf32>,
    %68 = vector.extract_strided_slice %0 {offsets = [0, 104], sizes = [2, 8], strides = [1, 1]} : vector<2x1024xf32> to vector<2x8xf32>
    %69 = arith.addf %58, %68 : vector<2x8xf32>
    %cst_18 = arith.constant 1.100000e+01 : f32
    %70 = vector.broadcast %cst_18 : f32 to vector<2x8xf32>
    %71 = arith.mulf %70, %33 : vector<2x8xf32>
    %72 = arith.addf %69, %71 : vector<2x8xf32>
    %cst_19 = arith.constant 4.000000e-02 : f32
    %73 = vector.broadcast %cst_19 : f32 to vector<2x8xf32>
    %74 = arith.mulf %72, %73 : vector<2x8xf32>
    %c0_20 = arith.constant 0 : index
    %c8 = arith.constant 8 : index
    %75 = vector.load %arg3[%c0_20, %c8] : memref<2x1024xf32, #tpu.memory_space<vmem>>, vector<2x8xf32>
    tpu.vector_store %arg3[%c0_20, %c8], %74 {strides = array<i32>} : memref<2x1024xf32, #tpu.memory_space<vmem>>, vector<2x8xf32>,
    %76 = vector.extract_strided_slice %0 {offsets = [0, 8], sizes = [2, 8], strides = [1, 1]} : vector<2x1024xf32> to vector<2x8xf32>
    %77 = arith.subf %76, %74 : vector<2x8xf32>
    %c0_21 = arith.constant 0 : index
    %c8_22 = arith.constant 8 : index
    %78 = vector.load %arg2[%c0_21, %c8_22] : memref<2x1024xf32, #tpu.memory_space<vmem>>, vector<2x8xf32>
    tpu.vector_store %arg2[%c0_21, %c8_22], %77 {strides = array<i32>} : memref<2x1024xf32, #tpu.memory_space<vmem>>, vector<2x8xf32>,
    %79 = vector.extract_strided_slice %0 {offsets = [0, 112], sizes = [2, 8], strides = [1, 1]} : vector<2x1024xf32> to vector<2x8xf32>
    %80 = arith.addf %69, %79 : vector<2x8xf32>
    %cst_23 = arith.constant 1.000000e+01 : f32
    %81 = vector.broadcast %cst_23 : f32 to vector<2x8xf32>
    %82 = arith.mulf %81, %33 : vector<2x8xf32>
    %83 = arith.addf %80, %82 : vector<2x8xf32>
    %cst_24 = arith.constant 4.000000e-02 : f32
    %84 = vector.broadcast %cst_24 : f32 to vector<2x8xf32>
    %85 = arith.mulf %83, %84 : vector<2x8xf32>
    %c0_25 = arith.constant 0 : index
    %c16 = arith.constant 16 : index
    %86 = vector.load %arg3[%c0_25, %c16] : memref<2x1024xf32, #tpu.memory_space<vmem>>, vector<2x8xf32>
    tpu.vector_store %arg3[%c0_25, %c16], %85 {strides = array<i32>} : memref<2x1024xf32, #tpu.memory_space<vmem>>, vector<2x8xf32>,
    %87 = vector.extract_strided_slice %0 {offsets = [0, 16], sizes = [2, 8], strides = [1, 1]} : vector<2x1024xf32> to vector<2x8xf32>
    %88 = arith.subf %87, %85 : vector<2x8xf32>
    %c0_26 = arith.constant 0 : index
    %c16_27 = arith.constant 16 : index
    %89 = vector.load %arg2[%c0_26, %c16_27] : memref<2x1024xf32, #tpu.memory_space<vmem>>, vector<2x8xf32>
    tpu.vector_store %arg2[%c0_26, %c16_27], %88 {strides = array<i32>} : memref<2x1024xf32, #tpu.memory_space<vmem>>, vector<2x8xf32>,
    %90 = vector.extract_strided_slice %0 {offsets = [0, 120], sizes = [2, 8], strides = [1, 1]} : vector<2x1024xf32> to vector<2x8xf32>
    %91 = arith.addf %80, %90 : vector<2x8xf32>
    %cst_28 = arith.constant 9.000000e+00 : f32
    %92 = vector.broadcast %cst_28 : f32 to vector<2x8xf32>
    %93 = arith.mulf %92, %33 : vector<2x8xf32>
    %94 = arith.addf %91, %93 : vector<2x8xf32>
    %cst_29 = arith.constant 4.000000e-02 : f32
    %95 = vector.broadcast %cst_29 : f32 to vector<2x8xf32>
    %96 = arith.mulf %94, %95 : vector<2x8xf32>
    %c0_30 = arith.constant 0 : index
    %c24 = arith.constant 24 : index
    %97 = vector.load %arg3[%c0_30, %c24] : memref<2x1024xf32, #tpu.memory_space<vmem>>, vector<2x8xf32>
    tpu.vector_store %arg3[%c0_30, %c24], %96 {strides = array<i32>} : memref<2x1024xf32, #tpu.memory_space<vmem>>, vector<2x8xf32>,
    %98 = vector.extract_strided_slice %0 {offsets = [0, 24], sizes = [2, 8], strides = [1, 1]} : vector<2x1024xf32> to vector<2x8xf32>
    %99 = arith.subf %98, %96 : vector<2x8xf32>
    %c0_31 = arith.constant 0 : index
    %c24_32 = arith.constant 24 : index
    %100 = vector.load %arg2[%c0_31, %c24_32] : memref<2x1024xf32, #tpu.memory_space<vmem>>, vector<2x8xf32>
    tpu.vector_store %arg2[%c0_31, %c24_32], %99 {strides = array<i32>} : memref<2x1024xf32, #tpu.memory_space<vmem>>, vector<2x8xf32>,
    %101 = vector.extract_strided_slice %0 {offsets = [0, 128], sizes = [2, 8], strides = [1, 1]} : vector<2x1024xf32> to vector<2x8xf32>
    %102 = arith.addf %91, %101 : vector<2x8xf32>
    %cst_33 = arith.constant 8.000000e+00 : f32
    %103 = vector.broadcast %cst_33 : f32 to vector<2x8xf32>
    %104 = arith.mulf %103, %33 : vector<2x8xf32>
    %105 = arith.addf %102, %104 : vector<2x8xf32>
    %cst_34 = arith.constant 4.000000e-02 : f32
    %106 = vector.broadcast %cst_34 : f32 to vector<2x8xf32>
    %107 = arith.mulf %105, %106 : vector<2x8xf32>
    %c0_35 = arith.constant 0 : index
    %c32 = arith.constant 32 : index
    %108 = vector.load %arg3[%c0_35, %c32] : memref<2x1024xf32, #tpu.memory_space<vmem>>, vector<2x8xf32>
    tpu.vector_store %arg3[%c0_35, %c32], %107 {strides = array<i32>} : memref<2x1024xf32, #tpu.memory_space<vmem>>, vector<2x8xf32>,
    %109 = vector.extract_strided_slice %0 {offsets = [0, 32], sizes = [2, 8], strides = [1, 1]} : vector<2x1024xf32> to vector<2x8xf32>
    %110 = arith.subf %109, %107 : vector<2x8xf32>
    %c0_36 = arith.constant 0 : index
    %c32_37 = arith.constant 32 : index
    %111 = vector.load %arg2[%c0_36, %c32_37] : memref<2x1024xf32, #tpu.memory_space<vmem>>, vector<2x8xf32>
    tpu.vector_store %arg2[%c0_36, %c32_37], %110 {strides = array<i32>} : memref<2x1024xf32, #tpu.memory_space<vmem>>, vector<2x8xf32>,
    %112 = vector.extract_strided_slice %0 {offsets = [0, 136], sizes = [2, 8], strides = [1, 1]} : vector<2x1024xf32> to vector<2x8xf32>
    %113 = arith.addf %102, %112 : vector<2x8xf32>
    %cst_38 = arith.constant 7.000000e+00 : f32
    %114 = vector.broadcast %cst_38 : f32 to vector<2x8xf32>
    %115 = arith.mulf %114, %33 : vector<2x8xf32>
    %116 = arith.addf %113, %115 : vector<2x8xf32>
    %cst_39 = arith.constant 4.000000e-02 : f32
    %117 = vector.broadcast %cst_39 : f32 to vector<2x8xf32>
    %118 = arith.mulf %116, %117 : vector<2x8xf32>
    %c0_40 = arith.constant 0 : index
    %c40 = arith.constant 40 : index
    %119 = vector.load %arg3[%c0_40, %c40] : memref<2x1024xf32, #tpu.memory_space<vmem>>, vector<2x8xf32>
    tpu.vector_store %arg3[%c0_40, %c40], %118 {strides = array<i32>} : memref<2x1024xf32, #tpu.memory_space<vmem>>, vector<2x8xf32>,
    %120 = vector.extract_strided_slice %0 {offsets = [0, 40], sizes = [2, 8], strides = [1, 1]} : vector<2x1024xf32> to vector<2x8xf32>
    %121 = arith.subf %120, %118 : vector<2x8xf32>
    %c0_41 = arith.constant 0 : index
    %c40_42 = arith.constant 40 : index
    %122 = vector.load %arg2[%c0_41, %c40_42] : memref<2x1024xf32, #tpu.memory_space<vmem>>, vector<2x8xf32>
    tpu.vector_store %arg2[%c0_41, %c40_42], %121 {strides = array<i32>} : memref<2x1024xf32, #tpu.memory_space<vmem>>, vector<2x8xf32>,
    %123 = vector.extract_strided_slice %0 {offsets = [0, 144], sizes = [2, 8], strides = [1, 1]} : vector<2x1024xf32> to vector<2x8xf32>
    %124 = arith.addf %113, %123 : vector<2x8xf32>
    %cst_43 = arith.constant 6.000000e+00 : f32
    %125 = vector.broadcast %cst_43 : f32 to vector<2x8xf32>
    %126 = arith.mulf %125, %33 : vector<2x8xf32>
    %127 = arith.addf %124, %126 : vector<2x8xf32>
    %cst_44 = arith.constant 4.000000e-02 : f32
    %128 = vector.broadcast %cst_44 : f32 to vector<2x8xf32>
    %129 = arith.mulf %127, %128 : vector<2x8xf32>
    %c0_45 = arith.constant 0 : index
    %c48 = arith.constant 48 : index
    %130 = vector.load %arg3[%c0_45, %c48] : memref<2x1024xf32, #tpu.memory_space<vmem>>, vector<2x8xf32>
    tpu.vector_store %arg3[%c0_45, %c48], %129 {strides = array<i32>} : memref<2x1024xf32, #tpu.memory_space<vmem>>, vector<2x8xf32>,
    %131 = vector.extract_strided_slice %0 {offsets = [0, 48], sizes = [2, 8], strides = [1, 1]} : vector<2x1024xf32> to vector<2x8xf32>
    %132 = arith.subf %131, %129 : vector<2x8xf32>
    %c0_46 = arith.constant 0 : index
    %c48_47 = arith.constant 48 : index
    %133 = vector.load %arg2[%c0_46, %c48_47] : memref<2x1024xf32, #tpu.memory_space<vmem>>, vector<2x8xf32>
    tpu.vector_store %arg2[%c0_46, %c48_47], %132 {strides = array<i32>} : memref<2x1024xf32, #tpu.memory_space<vmem>>, vector<2x8xf32>,
    %134 = vector.extract_strided_slice %0 {offsets = [0, 152], sizes = [2, 8], strides = [1, 1]} : vector<2x1024xf32> to vector<2x8xf32>
    %135 = arith.addf %124, %134 : vector<2x8xf32>
    %cst_48 = arith.constant 5.000000e+00 : f32
    %136 = vector.broadcast %cst_48 : f32 to vector<2x8xf32>
    %137 = arith.mulf %136, %33 : vector<2x8xf32>
    %138 = arith.addf %135, %137 : vector<2x8xf32>
    %cst_49 = arith.constant 4.000000e-02 : f32
    %139 = vector.broadcast %cst_49 : f32 to vector<2x8xf32>
    %140 = arith.mulf %138, %139 : vector<2x8xf32>
    %c0_50 = arith.constant 0 : index
    %c56 = arith.constant 56 : index
    %141 = vector.load %arg3[%c0_50, %c56] : memref<2x1024xf32, #tpu.memory_space<vmem>>, vector<2x8xf32>
    tpu.vector_store %arg3[%c0_50, %c56], %140 {strides = array<i32>} : memref<2x1024xf32, #tpu.memory_space<vmem>>, vector<2x8xf32>,
    %142 = vector.extract_strided_slice %0 {offsets = [0, 56], sizes = [2, 8], strides = [1, 1]} : vector<2x1024xf32> to vector<2x8xf32>
    %143 = arith.subf %142, %140 : vector<2x8xf32>
    %c0_51 = arith.constant 0 : index
    %c56_52 = arith.constant 56 : index
    %144 = vector.load %arg2[%c0_51, %c56_52] : memref<2x1024xf32, #tpu.memory_space<vmem>>, vector<2x8xf32>
    tpu.vector_store %arg2[%c0_51, %c56_52], %143 {strides = array<i32>} : memref<2x1024xf32, #tpu.memory_space<vmem>>, vector<2x8xf32>,
    %145 = vector.extract_strided_slice %0 {offsets = [0, 160], sizes = [2, 8], strides = [1, 1]} : vector<2x1024xf32> to vector<2x8xf32>
    %146 = arith.addf %135, %145 : vector<2x8xf32>
    %cst_53 = arith.constant 4.000000e+00 : f32
    %147 = vector.broadcast %cst_53 : f32 to vector<2x8xf32>
    %148 = arith.mulf %147, %33 : vector<2x8xf32>
    %149 = arith.addf %146, %148 : vector<2x8xf32>
    %cst_54 = arith.constant 4.000000e-02 : f32
    %150 = vector.broadcast %cst_54 : f32 to vector<2x8xf32>
    %151 = arith.mulf %149, %150 : vector<2x8xf32>
    %c0_55 = arith.constant 0 : index
    %c64 = arith.constant 64 : index
    %152 = vector.load %arg3[%c0_55, %c64] : memref<2x1024xf32, #tpu.memory_space<vmem>>, vector<2x8xf32>
    tpu.vector_store %arg3[%c0_55, %c64], %151 {strides = array<i32>} : memref<2x1024xf32, #tpu.memory_space<vmem>>, vector<2x8xf32>,
    %153 = vector.extract_strided_slice %0 {offsets = [0, 64], sizes = [2, 8], strides = [1, 1]} : vector<2x1024xf32> to vector<2x8xf32>
    %154 = arith.subf %153, %151 : vector<2x8xf32>
    %c0_56 = arith.constant 0 : index
    %c64_57 = arith.constant 64 : index
    %155 = vector.load %arg2[%c0_56, %c64_57] : memref<2x1024xf32, #tpu.memory_space<vmem>>, vector<2x8xf32>
    tpu.vector_store %arg2[%c0_56, %c64_57], %154 {strides = array<i32>} : memref<2x1024xf32, #tpu.memory_space<vmem>>, vector<2x8xf32>,
    %156 = vector.extract_strided_slice %0 {offsets = [0, 168], sizes = [2, 8], strides = [1, 1]} : vector<2x1024xf32> to vector<2x8xf32>
    %157 = arith.addf %146, %156 : vector<2x8xf32>
    %cst_58 = arith.constant 3.000000e+00 : f32
    %158 = vector.broadcast %cst_58 : f32 to vector<2x8xf32>
    %159 = arith.mulf %158, %33 : vector<2x8xf32>
    %160 = arith.addf %157, %159 : vector<2x8xf32>
    %cst_59 = arith.constant 4.000000e-02 : f32
    %161 = vector.broadcast %cst_59 : f32 to vector<2x8xf32>
    %162 = arith.mulf %160, %161 : vector<2x8xf32>
    %c0_60 = arith.constant 0 : index
    %c72 = arith.constant 72 : index
    %163 = vector.load %arg3[%c0_60, %c72] : memref<2x1024xf32, #tpu.memory_space<vmem>>, vector<2x8xf32>
    tpu.vector_store %arg3[%c0_60, %c72], %162 {strides = array<i32>} : memref<2x1024xf32, #tpu.memory_space<vmem>>, vector<2x8xf32>,
    %164 = vector.extract_strided_slice %0 {offsets = [0, 72], sizes = [2, 8], strides = [1, 1]} : vector<2x1024xf32> to vector<2x8xf32>
    %165 = arith.subf %164, %162 : vector<2x8xf32>
    %c0_61 = arith.constant 0 : index
    %c72_62 = arith.constant 72 : index
    %166 = vector.load %arg2[%c0_61, %c72_62] : memref<2x1024xf32, #tpu.memory_space<vmem>>, vector<2x8xf32>
    tpu.vector_store %arg2[%c0_61, %c72_62], %165 {strides = array<i32>} : memref<2x1024xf32, #tpu.memory_space<vmem>>, vector<2x8xf32>,
    %167 = vector.extract_strided_slice %0 {offsets = [0, 176], sizes = [2, 8], strides = [1, 1]} : vector<2x1024xf32> to vector<2x8xf32>
    %168 = arith.addf %157, %167 : vector<2x8xf32>
    %cst_63 = arith.constant 2.000000e+00 : f32
    %169 = vector.broadcast %cst_63 : f32 to vector<2x8xf32>
    %170 = arith.mulf %169, %33 : vector<2x8xf32>
    %171 = arith.addf %168, %170 : vector<2x8xf32>
    %cst_64 = arith.constant 4.000000e-02 : f32
    %172 = vector.broadcast %cst_64 : f32 to vector<2x8xf32>
    %173 = arith.mulf %171, %172 : vector<2x8xf32>
    %c0_65 = arith.constant 0 : index
    %c80 = arith.constant 80 : index
    %174 = vector.load %arg3[%c0_65, %c80] : memref<2x1024xf32, #tpu.memory_space<vmem>>, vector<2x8xf32>
    tpu.vector_store %arg3[%c0_65, %c80], %173 {strides = array<i32>} : memref<2x1024xf32, #tpu.memory_space<vmem>>, vector<2x8xf32>,
    %175 = vector.extract_strided_slice %0 {offsets = [0, 80], sizes = [2, 8], strides = [1, 1]} : vector<2x1024xf32> to vector<2x8xf32>
    %176 = arith.subf %175, %173 : vector<2x8xf32>
    %c0_66 = arith.constant 0 : index
    %c80_67 = arith.constant 80 : index
    %177 = vector.load %arg2[%c0_66, %c80_67] : memref<2x1024xf32, #tpu.memory_space<vmem>>, vector<2x8xf32>
    tpu.vector_store %arg2[%c0_66, %c80_67], %176 {strides = array<i32>} : memref<2x1024xf32, #tpu.memory_space<vmem>>, vector<2x8xf32>,
    %178 = vector.extract_strided_slice %0 {offsets = [0, 184], sizes = [2, 8], strides = [1, 1]} : vector<2x1024xf32> to vector<2x8xf32>
    %179 = arith.addf %168, %178 : vector<2x8xf32>
    %cst_68 = arith.constant 1.000000e+00 : f32
    %180 = vector.broadcast %cst_68 : f32 to vector<2x8xf32>
    %181 = arith.mulf %180, %33 : vector<2x8xf32>
    %182 = arith.addf %179, %181 : vector<2x8xf32>
    %cst_69 = arith.constant 4.000000e-02 : f32
    %183 = vector.broadcast %cst_69 : f32 to vector<2x8xf32>
    %184 = arith.mulf %182, %183 : vector<2x8xf32>
    %c0_70 = arith.constant 0 : index
    %c88 = arith.constant 88 : index
    %185 = vector.load %arg3[%c0_70, %c88] : memref<2x1024xf32, #tpu.memory_space<vmem>>, vector<2x8xf32>
    tpu.vector_store %arg3[%c0_70, %c88], %184 {strides = array<i32>} : memref<2x1024xf32, #tpu.memory_space<vmem>>, vector<2x8xf32>,
    %186 = vector.extract_strided_slice %0 {offsets = [0, 88], sizes = [2, 8], strides = [1, 1]} : vector<2x1024xf32> to vector<2x8xf32>
    %187 = arith.subf %186, %184 : vector<2x8xf32>
    %c0_71 = arith.constant 0 : index
    %c88_72 = arith.constant 88 : index
    %188 = vector.load %arg2[%c0_71, %c88_72] : memref<2x1024xf32, #tpu.memory_space<vmem>>, vector<2x8xf32>
    tpu.vector_store %arg2[%c0_71, %c88_72], %187 {strides = array<i32>} : memref<2x1024xf32, #tpu.memory_space<vmem>>, vector<2x8xf32>,
    %189 = vector.extract_strided_slice %27 {offsets = [0, 928], sizes = [2, 8], strides = [1, 1]} : vector<2x1024xf32> to vector<2x8xf32>
    %cst_73 = arith.constant 1.000000e+00 : f32
    %190 = vector.broadcast %cst_73 : f32 to vector<2x8xf32>
    %191 = arith.mulf %190, %34 : vector<2x8xf32>
    %192 = arith.addf %189, %191 : vector<2x8xf32>
    %cst_74 = arith.constant 4.000000e-02 : f32
    %193 = vector.broadcast %cst_74 : f32 to vector<2x8xf32>
    %194 = arith.mulf %192, %193 : vector<2x8xf32>
    %c0_75 = arith.constant 0 : index
    %c928 = arith.constant 928 : index
    %195 = vector.load %arg3[%c0_75, %c928] : memref<2x1024xf32, #tpu.memory_space<vmem>>, vector<2x8xf32>
    tpu.vector_store %arg3[%c0_75, %c928], %194 {strides = array<i32>} : memref<2x1024xf32, #tpu.memory_space<vmem>>, vector<2x8xf32>,
    %196 = vector.extract_strided_slice %0 {offsets = [0, 928], sizes = [2, 8], strides = [1, 1]} : vector<2x1024xf32> to vector<2x8xf32>
    %197 = arith.subf %196, %194 : vector<2x8xf32>
    %c0_76 = arith.constant 0 : index
    %c928_77 = arith.constant 928 : index
    %198 = vector.load %arg2[%c0_76, %c928_77] : memref<2x1024xf32, #tpu.memory_space<vmem>>, vector<2x8xf32>
    tpu.vector_store %arg2[%c0_76, %c928_77], %197 {strides = array<i32>} : memref<2x1024xf32, #tpu.memory_space<vmem>>, vector<2x8xf32>,
    %199 = vector.extract_strided_slice %27 {offsets = [0, 936], sizes = [2, 8], strides = [1, 1]} : vector<2x1024xf32> to vector<2x8xf32>
    %cst_78 = arith.constant 2.000000e+00 : f32
    %200 = vector.broadcast %cst_78 : f32 to vector<2x8xf32>
    %201 = arith.mulf %200, %34 : vector<2x8xf32>
    %202 = arith.addf %199, %201 : vector<2x8xf32>
    %cst_79 = arith.constant 4.000000e-02 : f32
    %203 = vector.broadcast %cst_79 : f32 to vector<2x8xf32>
    %204 = arith.mulf %202, %203 : vector<2x8xf32>
    %c0_80 = arith.constant 0 : index
    %c936 = arith.constant 936 : index
    %205 = vector.load %arg3[%c0_80, %c936] : memref<2x1024xf32, #tpu.memory_space<vmem>>, vector<2x8xf32>
    tpu.vector_store %arg3[%c0_80, %c936], %204 {strides = array<i32>} : memref<2x1024xf32, #tpu.memory_space<vmem>>, vector<2x8xf32>,
    %206 = vector.extract_strided_slice %0 {offsets = [0, 936], sizes = [2, 8], strides = [1, 1]} : vector<2x1024xf32> to vector<2x8xf32>
    %207 = arith.subf %206, %204 : vector<2x8xf32>
    %c0_81 = arith.constant 0 : index
    %c936_82 = arith.constant 936 : index
    %208 = vector.load %arg2[%c0_81, %c936_82] : memref<2x1024xf32, #tpu.memory_space<vmem>>, vector<2x8xf32>
    tpu.vector_store %arg2[%c0_81, %c936_82], %207 {strides = array<i32>} : memref<2x1024xf32, #tpu.memory_space<vmem>>, vector<2x8xf32>,
    %209 = vector.extract_strided_slice %27 {offsets = [0, 944], sizes = [2, 8], strides = [1, 1]} : vector<2x1024xf32> to vector<2x8xf32>
    %cst_83 = arith.constant 3.000000e+00 : f32
    %210 = vector.broadcast %cst_83 : f32 to vector<2x8xf32>
    %211 = arith.mulf %210, %34 : vector<2x8xf32>
    %212 = arith.addf %209, %211 : vector<2x8xf32>
    %cst_84 = arith.constant 4.000000e-02 : f32
    %213 = vector.broadcast %cst_84 : f32 to vector<2x8xf32>
    %214 = arith.mulf %212, %213 : vector<2x8xf32>
    %c0_85 = arith.constant 0 : index
    %c944 = arith.constant 944 : index
    %215 = vector.load %arg3[%c0_85, %c944] : memref<2x1024xf32, #tpu.memory_space<vmem>>, vector<2x8xf32>
    tpu.vector_store %arg3[%c0_85, %c944], %214 {strides = array<i32>} : memref<2x1024xf32, #tpu.memory_space<vmem>>, vector<2x8xf32>,
    %216 = vector.extract_strided_slice %0 {offsets = [0, 944], sizes = [2, 8], strides = [1, 1]} : vector<2x1024xf32> to vector<2x8xf32>
    %217 = arith.subf %216, %214 : vector<2x8xf32>
    %c0_86 = arith.constant 0 : index
    %c944_87 = arith.constant 944 : index
    %218 = vector.load %arg2[%c0_86, %c944_87] : memref<2x1024xf32, #tpu.memory_space<vmem>>, vector<2x8xf32>
    tpu.vector_store %arg2[%c0_86, %c944_87], %217 {strides = array<i32>} : memref<2x1024xf32, #tpu.memory_space<vmem>>, vector<2x8xf32>,
    %219 = vector.extract_strided_slice %27 {offsets = [0, 952], sizes = [2, 8], strides = [1, 1]} : vector<2x1024xf32> to vector<2x8xf32>
    %cst_88 = arith.constant 4.000000e+00 : f32
    %220 = vector.broadcast %cst_88 : f32 to vector<2x8xf32>
    %221 = arith.mulf %220, %34 : vector<2x8xf32>
    %222 = arith.addf %219, %221 : vector<2x8xf32>
    %cst_89 = arith.constant 4.000000e-02 : f32
    %223 = vector.broadcast %cst_89 : f32 to vector<2x8xf32>
    %224 = arith.mulf %222, %223 : vector<2x8xf32>
    %c0_90 = arith.constant 0 : index
    %c952 = arith.constant 952 : index
    %225 = vector.load %arg3[%c0_90, %c952] : memref<2x1024xf32, #tpu.memory_space<vmem>>, vector<2x8xf32>
    tpu.vector_store %arg3[%c0_90, %c952], %224 {strides = array<i32>} : memref<2x1024xf32, #tpu.memory_space<vmem>>, vector<2x8xf32>,
    %226 = vector.extract_strided_slice %0 {offsets = [0, 952], sizes = [2, 8], strides = [1, 1]} : vector<2x1024xf32> to vector<2x8xf32>
    %227 = arith.subf %226, %224 : vector<2x8xf32>
    %c0_91 = arith.constant 0 : index
    %c952_92 = arith.constant 952 : index
    %228 = vector.load %arg2[%c0_91, %c952_92] : memref<2x1024xf32, #tpu.memory_space<vmem>>, vector<2x8xf32>
    tpu.vector_store %arg2[%c0_91, %c952_92], %227 {strides = array<i32>} : memref<2x1024xf32, #tpu.memory_space<vmem>>, vector<2x8xf32>,
    %229 = vector.extract_strided_slice %27 {offsets = [0, 960], sizes = [2, 8], strides = [1, 1]} : vector<2x1024xf32> to vector<2x8xf32>
    %cst_93 = arith.constant 5.000000e+00 : f32
    %230 = vector.broadcast %cst_93 : f32 to vector<2x8xf32>
    %231 = arith.mulf %230, %34 : vector<2x8xf32>
    %232 = arith.addf %229, %231 : vector<2x8xf32>
    %cst_94 = arith.constant 4.000000e-02 : f32
    %233 = vector.broadcast %cst_94 : f32 to vector<2x8xf32>
    %234 = arith.mulf %232, %233 : vector<2x8xf32>
    %c0_95 = arith.constant 0 : index
    %c960 = arith.constant 960 : index
    %235 = vector.load %arg3[%c0_95, %c960] : memref<2x1024xf32, #tpu.memory_space<vmem>>, vector<2x8xf32>
    tpu.vector_store %arg3[%c0_95, %c960], %234 {strides = array<i32>} : memref<2x1024xf32, #tpu.memory_space<vmem>>, vector<2x8xf32>,
    %236 = vector.extract_strided_slice %0 {offsets = [0, 960], sizes = [2, 8], strides = [1, 1]} : vector<2x1024xf32> to vector<2x8xf32>
    %237 = arith.subf %236, %234 : vector<2x8xf32>
    %c0_96 = arith.constant 0 : index
    %c960_97 = arith.constant 960 : index
    %238 = vector.load %arg2[%c0_96, %c960_97] : memref<2x1024xf32, #tpu.memory_space<vmem>>, vector<2x8xf32>
    tpu.vector_store %arg2[%c0_96, %c960_97], %237 {strides = array<i32>} : memref<2x1024xf32, #tpu.memory_space<vmem>>, vector<2x8xf32>,
    %239 = vector.extract_strided_slice %27 {offsets = [0, 968], sizes = [2, 8], strides = [1, 1]} : vector<2x1024xf32> to vector<2x8xf32>
    %cst_98 = arith.constant 6.000000e+00 : f32
    %240 = vector.broadcast %cst_98 : f32 to vector<2x8xf32>
    %241 = arith.mulf %240, %34 : vector<2x8xf32>
    %242 = arith.addf %239, %241 : vector<2x8xf32>
    %cst_99 = arith.constant 4.000000e-02 : f32
    %243 = vector.broadcast %cst_99 : f32 to vector<2x8xf32>
    %244 = arith.mulf %242, %243 : vector<2x8xf32>
    %c0_100 = arith.constant 0 : index
    %c968 = arith.constant 968 : index
    %245 = vector.load %arg3[%c0_100, %c968] : memref<2x1024xf32, #tpu.memory_space<vmem>>, vector<2x8xf32>
    tpu.vector_store %arg3[%c0_100, %c968], %244 {strides = array<i32>} : memref<2x1024xf32, #tpu.memory_space<vmem>>, vector<2x8xf32>,
    %246 = vector.extract_strided_slice %0 {offsets = [0, 968], sizes = [2, 8], strides = [1, 1]} : vector<2x1024xf32> to vector<2x8xf32>
    %247 = arith.subf %246, %244 : vector<2x8xf32>
    %c0_101 = arith.constant 0 : index
    %c968_102 = arith.constant 968 : index
    %248 = vector.load %arg2[%c0_101, %c968_102] : memref<2x1024xf32, #tpu.memory_space<vmem>>, vector<2x8xf32>
    tpu.vector_store %arg2[%c0_101, %c968_102], %247 {strides = array<i32>} : memref<2x1024xf32, #tpu.memory_space<vmem>>, vector<2x8xf32>,
    %249 = vector.extract_strided_slice %27 {offsets = [0, 976], sizes = [2, 8], strides = [1, 1]} : vector<2x1024xf32> to vector<2x8xf32>
    %cst_103 = arith.constant 7.000000e+00 : f32
    %250 = vector.broadcast %cst_103 : f32 to vector<2x8xf32>
    %251 = arith.mulf %250, %34 : vector<2x8xf32>
    %252 = arith.addf %249, %251 : vector<2x8xf32>
    %cst_104 = arith.constant 4.000000e-02 : f32
    %253 = vector.broadcast %cst_104 : f32 to vector<2x8xf32>
    %254 = arith.mulf %252, %253 : vector<2x8xf32>
    %c0_105 = arith.constant 0 : index
    %c976 = arith.constant 976 : index
    %255 = vector.load %arg3[%c0_105, %c976] : memref<2x1024xf32, #tpu.memory_space<vmem>>, vector<2x8xf32>
    tpu.vector_store %arg3[%c0_105, %c976], %254 {strides = array<i32>} : memref<2x1024xf32, #tpu.memory_space<vmem>>, vector<2x8xf32>,
    %256 = vector.extract_strided_slice %0 {offsets = [0, 976], sizes = [2, 8], strides = [1, 1]} : vector<2x1024xf32> to vector<2x8xf32>
    %257 = arith.subf %256, %254 : vector<2x8xf32>
    %c0_106 = arith.constant 0 : index
    %c976_107 = arith.constant 976 : index
    %258 = vector.load %arg2[%c0_106, %c976_107] : memref<2x1024xf32, #tpu.memory_space<vmem>>, vector<2x8xf32>
    tpu.vector_store %arg2[%c0_106, %c976_107], %257 {strides = array<i32>} : memref<2x1024xf32, #tpu.memory_space<vmem>>, vector<2x8xf32>,
    %259 = vector.extract_strided_slice %27 {offsets = [0, 984], sizes = [2, 8], strides = [1, 1]} : vector<2x1024xf32> to vector<2x8xf32>
    %cst_108 = arith.constant 8.000000e+00 : f32
    %260 = vector.broadcast %cst_108 : f32 to vector<2x8xf32>
    %261 = arith.mulf %260, %34 : vector<2x8xf32>
    %262 = arith.addf %259, %261 : vector<2x8xf32>
    %cst_109 = arith.constant 4.000000e-02 : f32
    %263 = vector.broadcast %cst_109 : f32 to vector<2x8xf32>
    %264 = arith.mulf %262, %263 : vector<2x8xf32>
    %c0_110 = arith.constant 0 : index
    %c984 = arith.constant 984 : index
    %265 = vector.load %arg3[%c0_110, %c984] : memref<2x1024xf32, #tpu.memory_space<vmem>>, vector<2x8xf32>
    tpu.vector_store %arg3[%c0_110, %c984], %264 {strides = array<i32>} : memref<2x1024xf32, #tpu.memory_space<vmem>>, vector<2x8xf32>,
    %266 = vector.extract_strided_slice %0 {offsets = [0, 984], sizes = [2, 8], strides = [1, 1]} : vector<2x1024xf32> to vector<2x8xf32>
    %267 = arith.subf %266, %264 : vector<2x8xf32>
    %c0_111 = arith.constant 0 : index
    %c984_112 = arith.constant 984 : index
    %268 = vector.load %arg2[%c0_111, %c984_112] : memref<2x1024xf32, #tpu.memory_space<vmem>>, vector<2x8xf32>
    tpu.vector_store %arg2[%c0_111, %c984_112], %267 {strides = array<i32>} : memref<2x1024xf32, #tpu.memory_space<vmem>>, vector<2x8xf32>,
    %269 = vector.extract_strided_slice %27 {offsets = [0, 992], sizes = [2, 8], strides = [1, 1]} : vector<2x1024xf32> to vector<2x8xf32>
    %cst_113 = arith.constant 9.000000e+00 : f32
    %270 = vector.broadcast %cst_113 : f32 to vector<2x8xf32>
    %271 = arith.mulf %270, %34 : vector<2x8xf32>
    %272 = arith.addf %269, %271 : vector<2x8xf32>
    %cst_114 = arith.constant 4.000000e-02 : f32
    %273 = vector.broadcast %cst_114 : f32 to vector<2x8xf32>
    %274 = arith.mulf %272, %273 : vector<2x8xf32>
    %c0_115 = arith.constant 0 : index
    %c992 = arith.constant 992 : index
    %275 = vector.load %arg3[%c0_115, %c992] : memref<2x1024xf32, #tpu.memory_space<vmem>>, vector<2x8xf32>
    tpu.vector_store %arg3[%c0_115, %c992], %274 {strides = array<i32>} : memref<2x1024xf32, #tpu.memory_space<vmem>>, vector<2x8xf32>,
    %276 = vector.extract_strided_slice %0 {offsets = [0, 992], sizes = [2, 8], strides = [1, 1]} : vector<2x1024xf32> to vector<2x8xf32>
    %277 = arith.subf %276, %274 : vector<2x8xf32>
    %c0_116 = arith.constant 0 : index
    %c992_117 = arith.constant 992 : index
    %278 = vector.load %arg2[%c0_116, %c992_117] : memref<2x1024xf32, #tpu.memory_space<vmem>>, vector<2x8xf32>
    tpu.vector_store %arg2[%c0_116, %c992_117], %277 {strides = array<i32>} : memref<2x1024xf32, #tpu.memory_space<vmem>>, vector<2x8xf32>,
    %279 = vector.extract_strided_slice %27 {offsets = [0, 1000], sizes = [2, 8], strides = [1, 1]} : vector<2x1024xf32> to vector<2x8xf32>
    %cst_118 = arith.constant 1.000000e+01 : f32
    %280 = vector.broadcast %cst_118 : f32 to vector<2x8xf32>
    %281 = arith.mulf %280, %34 : vector<2x8xf32>
    %282 = arith.addf %279, %281 : vector<2x8xf32>
    %cst_119 = arith.constant 4.000000e-02 : f32
    %283 = vector.broadcast %cst_119 : f32 to vector<2x8xf32>
    %284 = arith.mulf %282, %283 : vector<2x8xf32>
    %c0_120 = arith.constant 0 : index
    %c1000 = arith.constant 1000 : index
    %285 = vector.load %arg3[%c0_120, %c1000] : memref<2x1024xf32, #tpu.memory_space<vmem>>, vector<2x8xf32>
    tpu.vector_store %arg3[%c0_120, %c1000], %284 {strides = array<i32>} : memref<2x1024xf32, #tpu.memory_space<vmem>>, vector<2x8xf32>,
    %286 = vector.extract_strided_slice %0 {offsets = [0, 1000], sizes = [2, 8], strides = [1, 1]} : vector<2x1024xf32> to vector<2x8xf32>
    %287 = arith.subf %286, %284 : vector<2x8xf32>
    %c0_121 = arith.constant 0 : index
    %c1000_122 = arith.constant 1000 : index
    %288 = vector.load %arg2[%c0_121, %c1000_122] : memref<2x1024xf32, #tpu.memory_space<vmem>>, vector<2x8xf32>
    tpu.vector_store %arg2[%c0_121, %c1000_122], %287 {strides = array<i32>} : memref<2x1024xf32, #tpu.memory_space<vmem>>, vector<2x8xf32>,
    %289 = vector.extract_strided_slice %27 {offsets = [0, 1008], sizes = [2, 8], strides = [1, 1]} : vector<2x1024xf32> to vector<2x8xf32>
    %cst_123 = arith.constant 1.100000e+01 : f32
    %290 = vector.broadcast %cst_123 : f32 to vector<2x8xf32>
    %291 = arith.mulf %290, %34 : vector<2x8xf32>
    %292 = arith.addf %289, %291 : vector<2x8xf32>
    %cst_124 = arith.constant 4.000000e-02 : f32
    %293 = vector.broadcast %cst_124 : f32 to vector<2x8xf32>
    %294 = arith.mulf %292, %293 : vector<2x8xf32>
    %c0_125 = arith.constant 0 : index
    %c1008 = arith.constant 1008 : index
    %295 = vector.load %arg3[%c0_125, %c1008] : memref<2x1024xf32, #tpu.memory_space<vmem>>, vector<2x8xf32>
    tpu.vector_store %arg3[%c0_125, %c1008], %294 {strides = array<i32>} : memref<2x1024xf32, #tpu.memory_space<vmem>>, vector<2x8xf32>,
    %296 = vector.extract_strided_slice %0 {offsets = [0, 1008], sizes = [2, 8], strides = [1, 1]} : vector<2x1024xf32> to vector<2x8xf32>
    %297 = arith.subf %296, %294 : vector<2x8xf32>
    %c0_126 = arith.constant 0 : index
    %c1008_127 = arith.constant 1008 : index
    %298 = vector.load %arg2[%c0_126, %c1008_127] : memref<2x1024xf32, #tpu.memory_space<vmem>>, vector<2x8xf32>
    tpu.vector_store %arg2[%c0_126, %c1008_127], %297 {strides = array<i32>} : memref<2x1024xf32, #tpu.memory_space<vmem>>, vector<2x8xf32>,
    %299 = vector.extract_strided_slice %27 {offsets = [0, 1016], sizes = [2, 8], strides = [1, 1]} : vector<2x1024xf32> to vector<2x8xf32>
    %cst_128 = arith.constant 1.200000e+01 : f32
    %300 = vector.broadcast %cst_128 : f32 to vector<2x8xf32>
    %301 = arith.mulf %300, %34 : vector<2x8xf32>
    %302 = arith.addf %299, %301 : vector<2x8xf32>
    %cst_129 = arith.constant 4.000000e-02 : f32
    %303 = vector.broadcast %cst_129 : f32 to vector<2x8xf32>
    %304 = arith.mulf %302, %303 : vector<2x8xf32>
    %c0_130 = arith.constant 0 : index
    %c1016 = arith.constant 1016 : index
    %305 = vector.load %arg3[%c0_130, %c1016] : memref<2x1024xf32, #tpu.memory_space<vmem>>, vector<2x8xf32>
    tpu.vector_store %arg3[%c0_130, %c1016], %304 {strides = array<i32>} : memref<2x1024xf32, #tpu.memory_space<vmem>>, vector<2x8xf32>,
    %306 = vector.extract_strided_slice %0 {offsets = [0, 1016], sizes = [2, 8], strides = [1, 1]} : vector<2x1024xf32> to vector<2x8xf32>
    %307 = arith.subf %306, %304 : vector<2x8xf32>
    %c0_131 = arith.constant 0 : index
    %c1016_132 = arith.constant 1016 : index
    %308 = vector.load %arg2[%c0_131, %c1016_132] : memref<2x1024xf32, #tpu.memory_space<vmem>>, vector<2x8xf32>
    tpu.vector_store %arg2[%c0_131, %c1016_132], %307 {strides = array<i32>} : memref<2x1024xf32, #tpu.memory_space<vmem>>, vector<2x8xf32>,
    return
  }
  func.func @transform_0(%arg0: i32) -> (i32, i32) {
    %c0_i32 = arith.constant 0 : i32
    %c0_i32_0 = arith.constant 0 : i32
    return %arg0, %c0_i32 : i32, i32
  }
  func.func @transform_1(%arg0: i32) -> (i32, i32) {
    %c0_i32 = arith.constant 0 : i32
    %c0_i32_0 = arith.constant 0 : i32
    return %arg0, %c0_i32 : i32, i32
  }
  func.func @transform_2(%arg0: i32) -> (i32, i32) {
    %c0_i32 = arith.constant 0 : i32
    %c0_i32_0 = arith.constant 0 : i32
    return %arg0, %c0_i32 : i32, i32
  }
}

</mosaic_0001>

<llo_original>
// kernel: series_decomp.1
$region0: #{series_decomp.1}
  #allocation0 [shape = 'u32[]', space=smem, size = 0x4, offset = 0x4, fixed_abs, tag = 'smem constant byte address 0x4 - core index']
  #allocation1 [shape = 'u32[144,128]{1,0:T(1,128)}', space=vmem, size = 0x12000, scoped, tag = 'internal scratch']
  %s0 = inlined_call_operand.vmem [shape: f32[2,1024], index: 0, kind: input, shape index: {}]
  %s1 = inlined_call_operand.vmem [shape: f32[2,1024], index: 1, kind: output, shape index: {0}]
  %s2 = inlined_call_operand.vmem [shape: f32[2,1024], index: 2, kind: output, shape index: {1}]
  %3 = xla_tuple %s1, %s2
  %s4 = sld [smem:[#allocation0]]
  $region22: #{series_decomp.1} parent=0
    _
  %s6 = ssub.s32 1, %s4
  %s7 = scalar_select 0, %s6, %s4
  // Predicated region
  $region2: #{series_decomp.1} parent=0 // pred_check
    _
  $region3: #{series_decomp.1} parent=0 // pred_check_branch
    %9 = sbr.rel (0) target = $region5
  $region4: #{series_decomp.1} parent=0 // pred_region
    _
  $region5: #{series_decomp.1} parent=0 // pred_fallthru
    _
  %v10 = vld [vmem:[%s0] sm:$0xff]
  %v11 = vld [vmem:[%s0 + $0x8] sm:$0xff]
  %v14 = vcombine.high %v10, %v10
  %v16 = vunpack.c.l.s4 1983009808
  %v17 = vunpack.c.0.s8 %v16
  %v18 = vlaneseq
  %v19 = vshrl.u32 %v18, 7
  %v20 = vsub.s32 %v17, %v19
  %v21 = vrot.slane %v10, %v20
  %v23 = vunpack.c.l.s4 1983009808
  %v24 = vunpack.c.0.s8 %v23
  %v25 = vlaneseq
  %v26 = vshrl.u32 %v25, 7
  %v27 = vsub.s32 %v24, %v26
  %v28 = vrot.slane %v14, %v27
  %v29 = vcombine.high %v21, %v21
  %v30 = vcombine.high %v28, %v28
  %v31 = vcombine.high %v11, %v11
  %v33 = vunpack.c.l.s4 1983009808
  %v34 = vunpack.c.0.s8 %v33
  %v35 = vlaneseq
  %v36 = vshrl.u32 %v35, 7
  %v37 = vsub.s32 %v34, %v36
  %v38 = vrot.slane %v11, %v37
  %v40 = vunpack.c.l.s4 1983009808
  %v41 = vunpack.c.0.s8 %v40
  %v42 = vlaneseq
  %v43 = vshrl.u32 %v42, 7
  %v44 = vsub.s32 %v41, %v43
  %v45 = vrot.slane %v31, %v44
  %v46 = vcombine.high %v38, %v38
  %v47 = vcombine.high %v45, %v45
  %48 = vrot.lane.b32.xlu0 %v21, 96
  %v49 = vpop.permute.xlu0 %48
  %50 = vrot.lane.b32.xlu0 %v29, 96
  %v51 = vpop.permute.xlu0 %50
  %52 = vrot.lane.b32.xlu0 %v28, 96
  %v53 = vpop.permute.xlu0 %52
  %54 = vrot.lane.b32.xlu0 %v30, 96
  %v55 = vpop.permute.xlu0 %54
  %56 = vrot.lane.b32.xlu0 %v38, 96
  %v57 = vpop.permute.xlu0 %56
  %58 = vrot.lane.b32.xlu0 %v46, 96
  %v59 = vpop.permute.xlu0 %58
  %60 = vrot.lane.b32.xlu0 %v45, 96
  %v61 = vpop.permute.xlu0 %60
  %62 = vrot.lane.b32.xlu0 %v47, 96
  %v63 = vpop.permute.xlu0 %62
  %vm64 = vcmask 785408
  %v65 = vsel %vm64, %v49, %v51
  %v66 = vsel %vm64, %v51, %v53
  %v67 = vsel %vm64, %v53, %v55
  %v68 = vsel %vm64, %v55, %v57
  %v69 = vsel %vm64, %v57, %v59
  %v70 = vsel %vm64, %v59, %v61
  %v71 = vsel %vm64, %v61, %v63
  %v80 = vsel %vm64, 0.0, %v49
  %81 = vrot.lane.b32.xlu0 %v21, 120
  %v82 = vpop.permute.xlu0 %81
  %83 = vrot.lane.b32.xlu0 %v29, 120
  %v84 = vpop.permute.xlu0 %83
  %85 = vrot.lane.b32.xlu0 %v28, 120
  %v86 = vpop.permute.xlu0 %85
  %87 = vrot.lane.b32.xlu0 %v30, 120
  %v88 = vpop.permute.xlu0 %87
  %89 = vrot.lane.b32.xlu0 %v38, 120
  %v90 = vpop.permute.xlu0 %89
  %91 = vrot.lane.b32.xlu0 %v46, 120
  %v92 = vpop.permute.xlu0 %91
  %93 = vrot.lane.b32.xlu0 %v45, 120
  %v94 = vpop.permute.xlu0 %93
  %95 = vrot.lane.b32.xlu0 %v47, 120
  %v96 = vpop.permute.xlu0 %95
  %vm97 = vcmask 982016
  %v98 = vsel %vm97, %v82, %v84
  %v99 = vsel %vm97, %v84, %v86
  %v100 = vsel %vm97, %v86, %v88
  %v101 = vsel %vm97, %v88, %v90
  %v102 = vsel %vm97, %v90, %v92
  %v103 = vsel %vm97, %v92, %v94
  %v104 = vsel %vm97, %v94, %v96
  %v106 = vsel %vm97, %v96, 0.0
  %v108 = vcombine.low %v98, %v99
  %v109 = vcombine.low %v100, %v101
  %v111 = vunpack.c.l.s4 1983009808
  %v112 = vunpack.c.0.s8 %v111
  %v113 = vlaneseq
  %v114 = vshrl.u32 %v113, 7
  %v115 = vsub.s32 %v112, %v114
  %v116 = vrot.slane %v108, %v115
  %v118 = vunpack.c.l.s4 1983009808
  %v119 = vunpack.c.0.s8 %v118
  %v120 = vlaneseq
  %v121 = vshrl.u32 %v120, 7
  %v122 = vsub.s32 %v119, %v121
  %v123 = vrot.slane %v109, %v122
  %v124 = vcombine.low %v116, %v123
  %v125 = vcombine.low %v102, %v103
  %v126 = vcombine.low %v104, %v106
  %v128 = vunpack.c.l.s4 1983009808
  %v129 = vunpack.c.0.s8 %v128
  %v130 = vlaneseq
  %v131 = vshrl.u32 %v130, 7
  %v132 = vsub.s32 %v129, %v131
  %v133 = vrot.slane %v125, %v132
  %v135 = vunpack.c.l.s4 1983009808
  %v136 = vunpack.c.0.s8 %v135
  %v137 = vlaneseq
  %v138 = vshrl.u32 %v137, 7
  %v139 = vsub.s32 %v136, %v138
  %v140 = vrot.slane %v126, %v139
  %v141 = vcombine.low %v133, %v140
  %v144 = vadd.f32 %v10, %v124
  %v145 = vadd.f32 %v11, %v141
  %v148 = vcombine.high %v144, %v144
  %v150 = vunpack.c.l.s4 1983009808
  %v151 = vunpack.c.0.s8 %v150
  %v152 = vlaneseq
  %v153 = vshrl.u32 %v152, 7
  %v154 = vsub.s32 %v151, %v153
  %v155 = vrot.slane %v144, %v154
  %v157 = vunpack.c.l.s4 1983009808
  %v158 = vunpack.c.0.s8 %v157
  %v159 = vlaneseq
  %v160 = vshrl.u32 %v159, 7
  %v161 = vsub.s32 %v158, %v160
  %v162 = vrot.slane %v148, %v161
  %v163 = vcombine.high %v155, %v155
  %v164 = vcombine.high %v162, %v162
  %v165 = vcombine.high %v145, %v145
  %v167 = vunpack.c.l.s4 1983009808
  %v168 = vunpack.c.0.s8 %v167
  %v169 = vlaneseq
  %v170 = vshrl.u32 %v169, 7
  %v171 = vsub.s32 %v168, %v170
  %v172 = vrot.slane %v145, %v171
  %v174 = vunpack.c.l.s4 1983009808
  %v175 = vunpack.c.0.s8 %v174
  %v176 = vlaneseq
  %v177 = vshrl.u32 %v176, 7
  %v178 = vsub.s32 %v175, %v177
  %v179 = vrot.slane %v165, %v178
  %v180 = vcombine.high %v172, %v172
  %v181 = vcombine.high %v179, %v179
  %182 = vrot.lane.b32.xlu0 %v155, 112
  %v183 = vpop.permute.xlu0 %182
  %184 = vrot.lane.b32.xlu0 %v163, 112
  %v185 = vpop.permute.xlu0 %184
  %186 = vrot.lane.b32.xlu0 %v162, 112
  %v187 = vpop.permute.xlu0 %186
  %188 = vrot.lane.b32.xlu0 %v164, 112
  %v189 = vpop.permute.xlu0 %188
  %190 = vrot.lane.b32.xlu0 %v172, 112
  %v191 = vpop.permute.xlu0 %190
  %192 = vrot.lane.b32.xlu0 %v180, 112
  %v193 = vpop.permute.xlu0 %192
  %194 = vrot.lane.b32.xlu0 %v179, 112
  %v195 = vpop.permute.xlu0 %194
  %196 = vrot.lane.b32.xlu0 %v181, 112
  %v197 = vpop.permute.xlu0 %196
  %vm198 = vcmask 916480
  %v199 = vsel %vm198, %v183, %v185
  %v200 = vsel %vm198, %v185, %v187
  %v201 = vsel %vm198, %v187, %v189
  %v202 = vsel %vm198, %v189, %v191
  %v203 = vsel %vm198, %v191, %v193
  %v204 = vsel %vm198, %v193, %v195
  %v205 = vsel %vm198, %v195, %v197
  %v207 = vsel %vm198, %v197, 0.0
  %v209 = vcombine.low %v199, %v200
  %v210 = vcombine.low %v201, %v202
  %v212 = vunpack.c.l.s4 1983009808
  %v213 = vunpack.c.0.s8 %v212
  %v214 = vlaneseq
  %v215 = vshrl.u32 %v214, 7
  %v216 = vsub.s32 %v213, %v215
  %v217 = vrot.slane %v209, %v216
  %v219 = vunpack.c.l.s4 1983009808
  %v220 = vunpack.c.0.s8 %v219
  %v221 = vlaneseq
  %v222 = vshrl.u32 %v221, 7
  %v223 = vsub.s32 %v220, %v222
  %v224 = vrot.slane %v210, %v223
  %v225 = vcombine.low %v217, %v224
  %v226 = vcombine.low %v203, %v204
  %v227 = vcombine.low %v205, %v207
  %v229 = vunpack.c.l.s4 1983009808
  %v230 = vunpack.c.0.s8 %v229
  %v231 = vlaneseq
  %v232 = vshrl.u32 %v231, 7
  %v233 = vsub.s32 %v230, %v232
  %v234 = vrot.slane %v226, %v233
  %v236 = vunpack.c.l.s4 1983009808
  %v237 = vunpack.c.0.s8 %v236
  %v238 = vlaneseq
  %v239 = vshrl.u32 %v238, 7
  %v240 = vsub.s32 %v237, %v239
  %v241 = vrot.slane %v227, %v240
  %v242 = vcombine.low %v234, %v241
  %v245 = vadd.f32 %v144, %v225
  %v246 = vadd.f32 %v145, %v242
  %v249 = vcombine.high %v245, %v245
  %v251 = vunpack.c.l.s4 1983009808
  %v252 = vunpack.c.0.s8 %v251
  %v253 = vlaneseq
  %v254 = vshrl.u32 %v253, 7
  %v255 = vsub.s32 %v252, %v254
  %v256 = vrot.slane %v245, %v255
  %v258 = vunpack.c.l.s4 1983009808
  %v259 = vunpack.c.0.s8 %v258
  %v260 = vlaneseq
  %v261 = vshrl.u32 %v260, 7
  %v262 = vsub.s32 %v259, %v261
  %v263 = vrot.slane %v249, %v262
  %v264 = vcombine.high %v256, %v256
  %v265 = vcombine.high %v263, %v263
  %v266 = vcombine.high %v246, %v246
  %v268 = vunpack.c.l.s4 1983009808
  %v269 = vunpack.c.0.s8 %v268
  %v270 = vlaneseq
  %v271 = vshrl.u32 %v270, 7
  %v272 = vsub.s32 %v269, %v271
  %v273 = vrot.slane %v246, %v272
  %v275 = vunpack.c.l.s4 1983009808
  %v276 = vunpack.c.0.s8 %v275
  %v277 = vlaneseq
  %v278 = vshrl.u32 %v277, 7
  %v279 = vsub.s32 %v276, %v278
  %v280 = vrot.slane %v266, %v279
  %v281 = vcombine.high %v273, %v273
  %v282 = vcombine.high %v280, %v280
  %283 = vrot.lane.b32.xlu0 %v256, 96
  %v284 = vpop.permute.xlu0 %283
  %285 = vrot.lane.b32.xlu0 %v264, 96
  %v286 = vpop.permute.xlu0 %285
  %287 = vrot.lane.b32.xlu0 %v263, 96
  %v288 = vpop.permute.xlu0 %287
  %289 = vrot.lane.b32.xlu0 %v265, 96
  %v290 = vpop.permute.xlu0 %289
  %291 = vrot.lane.b32.xlu0 %v273, 96
  %v292 = vpop.permute.xlu0 %291
  %293 = vrot.lane.b32.xlu0 %v281, 96
  %v294 = vpop.permute.xlu0 %293
  %295 = vrot.lane.b32.xlu0 %v280, 96
  %v296 = vpop.permute.xlu0 %295
  %297 = vrot.lane.b32.xlu0 %v282, 96
  %v298 = vpop.permute.xlu0 %297
  %v299 = vsel %vm64, %v284, %v286
  %v300 = vsel %vm64, %v286, %v288
  %v301 = vsel %vm64, %v288, %v290
  %v302 = vsel %vm64, %v290, %v292
  %v303 = vsel %vm64, %v292, %v294
  %v304 = vsel %vm64, %v294, %v296
  %v305 = vsel %vm64, %v296, %v298
  %v307 = vsel %vm64, %v298, 0.0
  %v309 = vcombine.low %v299, %v300
  %v310 = vcombine.low %v301, %v302
  %v312 = vunpack.c.l.s4 1983009808
  %v313 = vunpack.c.0.s8 %v312
  %v314 = vlaneseq
  %v315 = vshrl.u32 %v314, 7
  %v316 = vsub.s32 %v313, %v315
  %v317 = vrot.slane %v309, %v316
  %v319 = vunpack.c.l.s4 1983009808
  %v320 = vunpack.c.0.s8 %v319
  %v321 = vlaneseq
  %v322 = vshrl.u32 %v321, 7
  %v323 = vsub.s32 %v320, %v322
  %v324 = vrot.slane %v310, %v323
  %v325 = vcombine.low %v317, %v324
  %v326 = vcombine.low %v303, %v304
  %v327 = vcombine.low %v305, %v307
  %v329 = vunpack.c.l.s4 1983009808
  %v330 = vunpack.c.0.s8 %v329
  %v331 = vlaneseq
  %v332 = vshrl.u32 %v331, 7
  %v333 = vsub.s32 %v330, %v332
  %v334 = vrot.slane %v326, %v333
  %v336 = vunpack.c.l.s4 1983009808
  %v337 = vunpack.c.0.s8 %v336
  %v338 = vlaneseq
  %v339 = vshrl.u32 %v338, 7
  %v340 = vsub.s32 %v337, %v339
  %v341 = vrot.slane %v327, %v340
  %v342 = vcombine.low %v334, %v341
  %v345 = vadd.f32 %v245, %v325
  %v346 = vadd.f32 %v246, %v342
  %v349 = vcombine.high %v345, %v345
  %v351 = vunpack.c.l.s4 1983009808
  %v352 = vunpack.c.0.s8 %v351
  %v353 = vlaneseq
  %v354 = vshrl.u32 %v353, 7
  %v355 = vsub.s32 %v352, %v354
  %v356 = vrot.slane %v345, %v355
  %v358 = vunpack.c.l.s4 1983009808
  %v359 = vunpack.c.0.s8 %v358
  %v360 = vlaneseq
  %v361 = vshrl.u32 %v360, 7
  %v362 = vsub.s32 %v359, %v361
  %v363 = vrot.slane %v349, %v362
  %v364 = vcombine.high %v356, %v356
  %v365 = vcombine.high %v363, %v363
  %v366 = vcombine.high %v346, %v346
  %v368 = vunpack.c.l.s4 1983009808
  %v369 = vunpack.c.0.s8 %v368
  %v370 = vlaneseq
  %v371 = vshrl.u32 %v370, 7
  %v372 = vsub.s32 %v369, %v371
  %v373 = vrot.slane %v346, %v372
  %v375 = vunpack.c.l.s4 1983009808
  %v376 = vunpack.c.0.s8 %v375
  %v377 = vlaneseq
  %v378 = vshrl.u32 %v377, 7
  %v379 = vsub.s32 %v376, %v378
  %v380 = vrot.slane %v366, %v379
  %v381 = vcombine.high %v373, %v373
  %v382 = vcombine.high %v380, %v380
  %383 = vrot.lane.b32.xlu0 %v356, 88
  %v384 = vpop.permute.xlu0 %383
  %385 = vrot.lane.b32.xlu0 %v364, 88
  %v386 = vpop.permute.xlu0 %385
  %387 = vrot.lane.b32.xlu0 %v363, 88
  %v388 = vpop.permute.xlu0 %387
  %389 = vrot.lane.b32.xlu0 %v365, 88
  %v390 = vpop.permute.xlu0 %389
  %391 = vrot.lane.b32.xlu0 %v373, 88
  %v392 = vpop.permute.xlu0 %391
  %393 = vrot.lane.b32.xlu0 %v381, 88
  %v394 = vpop.permute.xlu0 %393
  %395 = vrot.lane.b32.xlu0 %v380, 88
  %v396 = vpop.permute.xlu0 %395
  %397 = vrot.lane.b32.xlu0 %v382, 88
  %v398 = vpop.permute.xlu0 %397
  %vm399 = vcmask 719872
  %v400 = vsel %vm399, %v384, %v386
  %v401 = vsel %vm399, %v386, %v388
  %v402 = vsel %vm399, %v388, %v390
  %v403 = vsel %vm399, %v390, %v392
  %v404 = vsel %vm399, %v392, %v394
  %v405 = vsel %vm399, %v394, %v396
  %v406 = vsel %vm399, %v396, %v398
  %v415 = vsel %vm399, 0.0, %v384
  %v416 = vadd.f32 %v80, %v415
  %v417 = vadd.f32 %v65, %v400
  %v418 = vadd.f32 %v66, %v401
  %v419 = vadd.f32 %v67, %v402
  %v420 = vadd.f32 %v68, %v403
  %v421 = vadd.f32 %v69, %v404
  %v422 = vadd.f32 %v70, %v405
  %v423 = vadd.f32 %v71, %v406
  %424 = vrot.lane.b32.xlu0 %v356, 64
  %v425 = vpop.permute.xlu0 %424
  %426 = vrot.lane.b32.xlu0 %v364, 64
  %v427 = vpop.permute.xlu0 %426
  %428 = vrot.lane.b32.xlu0 %v363, 64
  %v429 = vpop.permute.xlu0 %428
  %430 = vrot.lane.b32.xlu0 %v365, 64
  %v431 = vpop.permute.xlu0 %430
  %432 = vrot.lane.b32.xlu0 %v373, 64
  %v433 = vpop.permute.xlu0 %432
  %434 = vrot.lane.b32.xlu0 %v381, 64
  %v435 = vpop.permute.xlu0 %434
  %436 = vrot.lane.b32.xlu0 %v380, 64
  %v437 = vpop.permute.xlu0 %436
  %438 = vrot.lane.b32.xlu0 %v382, 64
  %v439 = vpop.permute.xlu0 %438
  %vm440 = vcmask 523264
  %v441 = vsel %vm440, %v425, %v427
  %v442 = vsel %vm440, %v427, %v429
  %v443 = vsel %vm440, %v429, %v431
  %v444 = vsel %vm440, %v431, %v433
  %v445 = vsel %vm440, %v433, %v435
  %v446 = vsel %vm440, %v435, %v437
  %v447 = vsel %vm440, %v437, %v439
  %v449 = vsel %vm440, %v439, 0.0
  %v451 = vcombine.low %v441, %v442
  %v452 = vcombine.low %v443, %v444
  %v454 = vunpack.c.l.s4 1983009808
  %v455 = vunpack.c.0.s8 %v454
  %v456 = vlaneseq
  %v457 = vshrl.u32 %v456, 7
  %v458 = vsub.s32 %v455, %v457
  %v459 = vrot.slane %v451, %v458
  %v461 = vunpack.c.l.s4 1983009808
  %v462 = vunpack.c.0.s8 %v461
  %v463 = vlaneseq
  %v464 = vshrl.u32 %v463, 7
  %v465 = vsub.s32 %v462, %v464
  %v466 = vrot.slane %v452, %v465
  %v467 = vcombine.low %v459, %v466
  %v468 = vcombine.low %v445, %v446
  %v469 = vcombine.low %v447, %v449
  %v471 = vunpack.c.l.s4 1983009808
  %v472 = vunpack.c.0.s8 %v471
  %v473 = vlaneseq
  %v474 = vshrl.u32 %v473, 7
  %v475 = vsub.s32 %v472, %v474
  %v476 = vrot.slane %v468, %v475
  %v478 = vunpack.c.l.s4 1983009808
  %v479 = vunpack.c.0.s8 %v478
  %v480 = vlaneseq
  %v481 = vshrl.u32 %v480, 7
  %v482 = vsub.s32 %v479, %v481
  %v483 = vrot.slane %v469, %v482
  %v484 = vcombine.low %v476, %v483
  %v487 = vadd.f32 %v345, %v467
  %v488 = vadd.f32 %v346, %v484
  %v491 = vcombine.high %v487, %v487
  %v493 = vunpack.c.l.s4 1983009808
  %v494 = vunpack.c.0.s8 %v493
  %v495 = vlaneseq
  %v496 = vshrl.u32 %v495, 7
  %v497 = vsub.s32 %v494, %v496
  %v498 = vrot.slane %v487, %v497
  %v500 = vunpack.c.l.s4 1983009808
  %v501 = vunpack.c.0.s8 %v500
  %v502 = vlaneseq
  %v503 = vshrl.u32 %v502, 7
  %v504 = vsub.s32 %v501, %v503
  %v505 = vrot.slane %v491, %v504
  %v506 = vcombine.high %v498, %v498
  %v507 = vcombine.high %v505, %v505
  %v508 = vcombine.high %v488, %v488
  %v510 = vunpack.c.l.s4 1983009808
  %v511 = vunpack.c.0.s8 %v510
  %v512 = vlaneseq
  %v513 = vshrl.u32 %v512, 7
  %v514 = vsub.s32 %v511, %v513
  %v515 = vrot.slane %v488, %v514
  %v517 = vunpack.c.l.s4 1983009808
  %v518 = vunpack.c.0.s8 %v517
  %v519 = vlaneseq
  %v520 = vshrl.u32 %v519, 7
  %v521 = vsub.s32 %v518, %v520
  %v522 = vrot.slane %v508, %v521
  %v523 = vcombine.high %v515, %v515
  %v524 = vcombine.high %v522, %v522
  %525 = vrot.lane.b32.xlu0 %v498, 24
  %v526 = vpop.permute.xlu0 %525
  %527 = vrot.lane.b32.xlu0 %v506, 24
  %v528 = vpop.permute.xlu0 %527
  %529 = vrot.lane.b32.xlu0 %v505, 24
  %v530 = vpop.permute.xlu0 %529
  %531 = vrot.lane.b32.xlu0 %v507, 24
  %v532 = vpop.permute.xlu0 %531
  %533 = vrot.lane.b32.xlu0 %v515, 24
  %v534 = vpop.permute.xlu0 %533
  %535 = vrot.lane.b32.xlu0 %v523, 24
  %v536 = vpop.permute.xlu0 %535
  %537 = vrot.lane.b32.xlu0 %v522, 24
  %v538 = vpop.permute.xlu0 %537
  %539 = vrot.lane.b32.xlu0 %v524, 24
  %v540 = vpop.permute.xlu0 %539
  %vm541 = vcmask 195584
  %v542 = vsel %vm541, %v526, %v528
  %v543 = vsel %vm541, %v528, %v530
  %v544 = vsel %vm541, %v530, %v532
  %v545 = vsel %vm541, %v532, %v534
  %v546 = vsel %vm541, %v534, %v536
  %v547 = vsel %vm541, %v536, %v538
  %v548 = vsel %vm541, %v538, %v540
  %v557 = vsel %vm541, 0.0, %v526
  %v558 = vadd.f32 %v416, %v557
  %v559 = vadd.f32 %v417, %v542
  %v560 = vadd.f32 %v418, %v543
  %v561 = vadd.f32 %v419, %v544
  %v562 = vadd.f32 %v420, %v545
  %v563 = vadd.f32 %v421, %v546
  %v564 = vadd.f32 %v422, %v547
  %v565 = vadd.f32 %v423, %v548
  %v566 = vmul.f32 %v558, 0.04
  %v567 = vmul.f32 %v559, 0.04
  %v568 = vmul.f32 %v560, 0.04
  %v569 = vmul.f32 %v561, 0.04
  %v570 = vmul.f32 %v562, 0.04
  %v571 = vmul.f32 %v563, 0.04
  %v572 = vmul.f32 %v564, 0.04
  %v573 = vmul.f32 %v565, 0.04
  %v582 = vcombine.low %v566, %v567
  %v583 = vcombine.low %v568, %v569
  %v585 = vunpack.c.l.s4 1983009808
  %v586 = vunpack.c.0.s8 %v585
  %v587 = vlaneseq
  %v588 = vshrl.u32 %v587, 7
  %v589 = vsub.s32 %v586, %v588
  %v590 = vrot.slane %v582, %v589
  %v592 = vunpack.c.l.s4 1983009808
  %v593 = vunpack.c.0.s8 %v592
  %v594 = vlaneseq
  %v595 = vshrl.u32 %v594, 7
  %v596 = vsub.s32 %v593, %v595
  %v597 = vrot.slane %v583, %v596
  %v598 = vcombine.low %v590, %v597
  %v599 = vcombine.low %v570, %v571
  %v600 = vcombine.low %v572, %v573
  %v602 = vunpack.c.l.s4 1983009808
  %v603 = vunpack.c.0.s8 %v602
  %v604 = vlaneseq
  %v605 = vshrl.u32 %v604, 7
  %v606 = vsub.s32 %v603, %v605
  %v607 = vrot.slane %v599, %v606
  %v609 = vunpack.c.l.s4 1983009808
  %v610 = vunpack.c.0.s8 %v609
  %v611 = vlaneseq
  %v612 = vshrl.u32 %v611, 7
  %v613 = vsub.s32 %v610, %v612
  %v614 = vrot.slane %v600, %v613
  %v615 = vcombine.low %v607, %v614
  %v618 = vsub.f32 %v10, %v598
  %v619 = vsub.f32 %v11, %v615
  %620 = vst [vmem:[%s1] sm:$0xff] %v618
  %621 = vst [vmem:[%s1 + $0x8] sm:$0xff] %v619
  %622 = vst [vmem:[%s2] sm:$0xff] %v598
  %623 = vst [vmem:[%s2 + $0x8] sm:$0xff] %v615
  %624 = vrot.lane.b32.xlu0 %v10, 120
  %v625 = vpop.permute.xlu0 %624
  %v627 = vadd.f32 %v10, %v625
  %628 = vrot.lane.b32.xlu0 %v10, 112
  %v629 = vpop.permute.xlu0 %628
  %v631 = vadd.f32 %v627, %v629
  %632 = vrot.lane.b32.xlu0 %v10, 104
  %v633 = vpop.permute.xlu0 %632
  %v635 = vadd.f32 %v631, %v633
  %636 = vrot.lane.b32.xlu0 %v10, 96
  %v637 = vpop.permute.xlu0 %636
  %v639 = vadd.f32 %v635, %v637
  %640 = vrot.lane.b32.xlu0 %v10, 88
  %v641 = vpop.permute.xlu0 %640
  %v643 = vadd.f32 %v639, %v641
  %644 = vrot.lane.b32.xlu0 %v10, 80
  %v645 = vpop.permute.xlu0 %644
  %v647 = vadd.f32 %v643, %v645
  %648 = vrot.lane.b32.xlu0 %v10, 72
  %v649 = vpop.permute.xlu0 %648
  %v651 = vadd.f32 %v647, %v649
  %652 = vrot.lane.b32.xlu0 %v10, 64
  %v653 = vpop.permute.xlu0 %652
  %v655 = vadd.f32 %v651, %v653
  %656 = vrot.lane.b32.xlu0 %v10, 56
  %v657 = vpop.permute.xlu0 %656
  %v659 = vadd.f32 %v655, %v657
  %660 = vrot.lane.b32.xlu0 %v10, 48
  %v661 = vpop.permute.xlu0 %660
  %v663 = vadd.f32 %v659, %v661
  %664 = vrot.lane.b32.xlu0 %v10, 40
  %v665 = vpop.permute.xlu0 %664
  %v667 = vadd.f32 %v663, %v665
  %668 = vrot.lane.b32.xlu0 %v10, 32
  %v669 = vpop.permute.xlu0 %668
  %v671 = vadd.f32 %v667, %v669
  %v672 = vmul.f32 %v10, 12.0
  %v673 = vadd.f32 %v671, %v672
  %v674 = vmul.f32 %v673, 0.04
  %vm675 = vcmask 58368
  %676 = vst.msk [vmem:[%s2] sm:$0x3] %vm675, %v674
  %v677 = vsub.f32 %v10, %v674
  %678 = vst.msk [vmem:[%s1] sm:$0x3] %vm675, %v677
  %679 = vrot.lane.b32.xlu0 %v10, 24
  %v680 = vpop.permute.xlu0 %679
  %v682 = vadd.f32 %v671, %v680
  %v683 = vmul.f32 %v10, 11.0
  %v684 = vadd.f32 %v682, %v683
  %v685 = vmul.f32 %v684, 0.04
  %687 = vrot.lane.b32.xlu0 %v685, 8
  %v688 = vpop.permute.xlu0 %687
  %vm690 = vcmask 123968
  %691 = vst.msk [vmem:[%s2] sm:$0x3] %vm690, %v688
  %v692 = vsub.f32 %v10, %v688
  %693 = vst.msk [vmem:[%s1] sm:$0x3] %vm690, %v692
  %694 = vrot.lane.b32.xlu0 %v10, 16
  %v695 = vpop.permute.xlu0 %694
  %v697 = vadd.f32 %v682, %v695
  %v698 = vmul.f32 %v10, 10.0
  %v699 = vadd.f32 %v697, %v698
  %v700 = vmul.f32 %v699, 0.04
  %702 = vrot.lane.b32.xlu0 %v700, 16
  %v703 = vpop.permute.xlu0 %702
  %vm705 = vcmask 189568
  %706 = vst.msk [vmem:[%s2] sm:$0x3] %vm705, %v703
  %v707 = vsub.f32 %v10, %v703
  %708 = vst.msk [vmem:[%s1] sm:$0x3] %vm705, %v707
  %709 = vrot.lane.b32.xlu0 %v10, 8
  %v710 = vpop.permute.xlu0 %709
  %v712 = vadd.f32 %v697, %v710
  %v713 = vmul.f32 %v10, 9.0
  %v714 = vadd.f32 %v712, %v713
  %v715 = vmul.f32 %v714, 0.04
  %717 = vrot.lane.b32.xlu0 %v715, 24
  %v718 = vpop.permute.xlu0 %717
  %vm720 = vcmask 255168
  %721 = vst.msk [vmem:[%s2] sm:$0x3] %vm720, %v718
  %v722 = vsub.f32 %v10, %v718
  %723 = vst.msk [vmem:[%s1] sm:$0x3] %vm720, %v722
  %v724 = vrot.slane %v10, 2
  %v726 = vadd.f32 %v712, %v724
  %v727 = vmul.f32 %v10, 8.0
  %v728 = vadd.f32 %v726, %v727
  %v729 = vmul.f32 %v728, 0.04
  %731 = vrot.lane.b32.xlu0 %v729, 32
  %v732 = vpop.permute.xlu0 %731
  %vm734 = vcmask 320768
  %735 = vst.msk [vmem:[%s2] sm:$0x3] %vm734, %v732
  %v736 = vsub.f32 %v10, %v732
  %737 = vst.msk [vmem:[%s1] sm:$0x3] %vm734, %v736
  %v738 = vrot.slane %v625, 2
  %v740 = vadd.f32 %v726, %v738
  %v741 = vmul.f32 %v10, 7.0
  %v742 = vadd.f32 %v740, %v741
  %v743 = vmul.f32 %v742, 0.04
  %745 = vrot.lane.b32.xlu0 %v743, 40
  %v746 = vpop.permute.xlu0 %745
  %vm748 = vcmask 386368
  %749 = vst.msk [vmem:[%s2] sm:$0x3] %vm748, %v746
  %v750 = vsub.f32 %v10, %v746
  %751 = vst.msk [vmem:[%s1] sm:$0x3] %vm748, %v750
  %v752 = vrot.slane %v629, 2
  %v754 = vadd.f32 %v740, %v752
  %v755 = vmul.f32 %v10, 6.0
  %v756 = vadd.f32 %v754, %v755
  %v757 = vmul.f32 %v756, 0.04
  %759 = vrot.lane.b32.xlu0 %v757, 48
  %v760 = vpop.permute.xlu0 %759
  %vm762 = vcmask 451968
  %763 = vst.msk [vmem:[%s2] sm:$0x3] %vm762, %v760
  %v764 = vsub.f32 %v10, %v760
  %765 = vst.msk [vmem:[%s1] sm:$0x3] %vm762, %v764
  %v766 = vrot.slane %v633, 2
  %v768 = vadd.f32 %v754, %v766
  %v769 = vmul.f32 %v10, 5.0
  %v770 = vadd.f32 %v768, %v769
  %v771 = vmul.f32 %v770, 0.04
  %773 = vrot.lane.b32.xlu0 %v771, 56
  %v774 = vpop.permute.xlu0 %773
  %vm776 = vcmask 517568
  %777 = vst.msk [vmem:[%s2] sm:$0x3] %vm776, %v774
  %v778 = vsub.f32 %v10, %v774
  %779 = vst.msk [vmem:[%s1] sm:$0x3] %vm776, %v778
  %v780 = vrot.slane %v637, 2
  %v782 = vadd.f32 %v768, %v780
  %v783 = vmul.f32 %v10, 4.0
  %v784 = vadd.f32 %v782, %v783
  %v785 = vmul.f32 %v784, 0.04
  %787 = vrot.lane.b32.xlu0 %v785, 64
  %v788 = vpop.permute.xlu0 %787
  %vm790 = vcmask 583168
  %791 = vst.msk [vmem:[%s2] sm:$0x3] %vm790, %v788
  %v792 = vsub.f32 %v10, %v788
  %793 = vst.msk [vmem:[%s1] sm:$0x3] %vm790, %v792
  %v794 = vrot.slane %v641, 2
  %v796 = vadd.f32 %v782, %v794
  %v797 = vmul.f32 %v10, 3.0
  %v798 = vadd.f32 %v796, %v797
  %v799 = vmul.f32 %v798, 0.04
  %801 = vrot.lane.b32.xlu0 %v799, 72
  %v802 = vpop.permute.xlu0 %801
  %vm804 = vcmask 648768
  %805 = vst.msk [vmem:[%s2] sm:$0x3] %vm804, %v802
  %v806 = vsub.f32 %v10, %v802
  %807 = vst.msk [vmem:[%s1] sm:$0x3] %vm804, %v806
  %v808 = vrot.slane %v645, 2
  %v810 = vadd.f32 %v796, %v808
  %v811 = vmul.f32 %v10, 2.0
  %v812 = vadd.f32 %v810, %v811
  %v813 = vmul.f32 %v812, 0.04
  %815 = vrot.lane.b32.xlu0 %v813, 80
  %v816 = vpop.permute.xlu0 %815
  %vm818 = vcmask 714368
  %819 = vst.msk [vmem:[%s2] sm:$0x3] %vm818, %v816
  %v820 = vsub.f32 %v10, %v816
  %821 = vst.msk [vmem:[%s1] sm:$0x3] %vm818, %v820
  %v822 = vrot.slane %v649, 2
  %v824 = vadd.f32 %v810, %v822
  %v825 = vadd.f32 %v824, %v10
  %v826 = vmul.f32 %v825, 0.04
  %828 = vrot.lane.b32.xlu0 %v826, 88
  %v829 = vpop.permute.xlu0 %828
  %vm831 = vcmask 779968
  %832 = vst.msk [vmem:[%s2] sm:$0x3] %vm831, %v829
  %v833 = vsub.f32 %v10, %v829
  %834 = vst.msk [vmem:[%s1] sm:$0x3] %vm831, %v833
  %835 = vrot.lane.b32.xlu0 %v47, 40
  %v836 = vpop.permute.xlu0 %835
  %v838 = vadd.f32 %v565, %v836
  %v839 = vmul.f32 %v838, 0.04
  %840 = vst.msk [vmem:[%s2 + $0xe] sm:$0x3] %vm734, %v839
  %841 = vrot.lane.b32.xlu0 %v11, 96
  %v842 = vpop.permute.xlu0 %841
  %v843 = vrot.slane %v842, 6
  %v847 = vunpack.c.l.s4 1983009808
  %v848 = vunpack.c.0.s8 %v847
  %v849 = vlaneseq
  %v850 = vshrl.u32 %v849, 7
  %v851 = vsub.s32 %v848, %v850
  %v852 = vrot.slane %v839, %v851
  %853 = vrot.lane.b32.xlu0 %v852, 96
  %v854 = vpop.permute.xlu0 %853
  %v856 = vsub.f32 %v843, %v854
  %858 = vrot.lane.b32.xlu0 %v856, 32
  %v859 = vpop.permute.xlu0 %858
  %861 = vst.msk [vmem:[%s1 + $0xe] sm:$0x3] %vm734, %v859
  %862 = vrot.lane.b32.xlu0 %v11, 8
  %v863 = vpop.permute.xlu0 %862
  %v864 = vrot.slane %v863, 6
  %v866 = vmul.f32 %v864, 2.0
  %v869 = vunpack.c.l.s4 1983009808
  %v870 = vunpack.c.0.s8 %v869
  %v871 = vlaneseq
  %v872 = vshrl.u32 %v871, 7
  %v873 = vsub.s32 %v870, %v872
  %v874 = vrot.slane %v866, %v873
  %875 = vrot.lane.b32.xlu0 %v874, 40
  %v876 = vpop.permute.xlu0 %875
  %v878 = vadd.f32 %v565, %v876
  %v879 = vmul.f32 %v878, 0.04
  %880 = vst.msk [vmem:[%s2 + $0xe] sm:$0x3] %vm748, %v879
  %881 = vrot.lane.b32.xlu0 %v11, 88
  %v882 = vpop.permute.xlu0 %881
  %v883 = vrot.slane %v882, 6
  %v887 = vunpack.c.l.s4 1983009808
  %v888 = vunpack.c.0.s8 %v887
  %v889 = vlaneseq
  %v890 = vshrl.u32 %v889, 7
  %v891 = vsub.s32 %v888, %v890
  %v892 = vrot.slane %v879, %v891
  %893 = vrot.lane.b32.xlu0 %v892, 88
  %v894 = vpop.permute.xlu0 %893
  %v896 = vsub.f32 %v883, %v894
  %898 = vrot.lane.b32.xlu0 %v896, 40
  %v899 = vpop.permute.xlu0 %898
  %901 = vst.msk [vmem:[%s1 + $0xe] sm:$0x3] %vm748, %v899
  %v902 = vmul.f32 %v864, 3.0
  %v905 = vunpack.c.l.s4 1983009808
  %v906 = vunpack.c.0.s8 %v905
  %v907 = vlaneseq
  %v908 = vshrl.u32 %v907, 7
  %v909 = vsub.s32 %v906, %v908
  %v910 = vrot.slane %v902, %v909
  %911 = vrot.lane.b32.xlu0 %v910, 48
  %v912 = vpop.permute.xlu0 %911
  %v914 = vadd.f32 %v565, %v912
  %v915 = vmul.f32 %v914, 0.04
  %916 = vst.msk [vmem:[%s2 + $0xe] sm:$0x3] %vm762, %v915
  %917 = vrot.lane.b32.xlu0 %v11, 80
  %v918 = vpop.permute.xlu0 %917
  %v919 = vrot.slane %v918, 6
  %v923 = vunpack.c.l.s4 1983009808
  %v924 = vunpack.c.0.s8 %v923
  %v925 = vlaneseq
  %v926 = vshrl.u32 %v925, 7
  %v927 = vsub.s32 %v924, %v926
  %v928 = vrot.slane %v915, %v927
  %929 = vrot.lane.b32.xlu0 %v928, 80
  %v930 = vpop.permute.xlu0 %929
  %v932 = vsub.f32 %v919, %v930
  %934 = vrot.lane.b32.xlu0 %v932, 48
  %v935 = vpop.permute.xlu0 %934
  %937 = vst.msk [vmem:[%s1 + $0xe] sm:$0x3] %vm762, %v935
  %v938 = vmul.f32 %v864, 4.0
  %v941 = vunpack.c.l.s4 1983009808
  %v942 = vunpack.c.0.s8 %v941
  %v943 = vlaneseq
  %v944 = vshrl.u32 %v943, 7
  %v945 = vsub.s32 %v942, %v944
  %v946 = vrot.slane %v938, %v945
  %947 = vrot.lane.b32.xlu0 %v946, 56
  %v948 = vpop.permute.xlu0 %947
  %v950 = vadd.f32 %v565, %v948
  %v951 = vmul.f32 %v950, 0.04
  %952 = vst.msk [vmem:[%s2 + $0xe] sm:$0x3] %vm776, %v951
  %953 = vrot.lane.b32.xlu0 %v11, 72
  %v954 = vpop.permute.xlu0 %953
  %v955 = vrot.slane %v954, 6
  %v959 = vunpack.c.l.s4 1983009808
  %v960 = vunpack.c.0.s8 %v959
  %v961 = vlaneseq
  %v962 = vshrl.u32 %v961, 7
  %v963 = vsub.s32 %v960, %v962
  %v964 = vrot.slane %v951, %v963
  %965 = vrot.lane.b32.xlu0 %v964, 72
  %v966 = vpop.permute.xlu0 %965
  %v968 = vsub.f32 %v955, %v966
  %970 = vrot.lane.b32.xlu0 %v968, 56
  %v971 = vpop.permute.xlu0 %970
  %973 = vst.msk [vmem:[%s1 + $0xe] sm:$0x3] %vm776, %v971
  %v974 = vmul.f32 %v864, 5.0
  %v977 = vunpack.c.l.s4 1983009808
  %v978 = vunpack.c.0.s8 %v977
  %v979 = vlaneseq
  %v980 = vshrl.u32 %v979, 7
  %v981 = vsub.s32 %v978, %v980
  %v982 = vrot.slane %v974, %v981
  %983 = vrot.lane.b32.xlu0 %v982, 64
  %v984 = vpop.permute.xlu0 %983
  %v986 = vadd.f32 %v565, %v984
  %v987 = vmul.f32 %v986, 0.04
  %988 = vst.msk [vmem:[%s2 + $0xe] sm:$0x3] %vm790, %v987
  %989 = vrot.lane.b32.xlu0 %v11, 64
  %v990 = vpop.permute.xlu0 %989
  %v991 = vrot.slane %v990, 6
  %v995 = vunpack.c.l.s4 1983009808
  %v996 = vunpack.c.0.s8 %v995
  %v997 = vlaneseq
  %v998 = vshrl.u32 %v997, 7
  %v999 = vsub.s32 %v996, %v998
  %v1000 = vrot.slane %v987, %v999
  %1001 = vrot.lane.b32.xlu0 %v1000, 64
  %v1002 = vpop.permute.xlu0 %1001
  %v1004 = vsub.f32 %v991, %v1002
  %1006 = vrot.lane.b32.xlu0 %v1004, 64
  %v1007 = vpop.permute.xlu0 %1006
  %1009 = vst.msk [vmem:[%s1 + $0xe] sm:$0x3] %vm790, %v1007
  %v1010 = vmul.f32 %v864, 6.0
  %v1013 = vunpack.c.l.s4 1983009808
  %v1014 = vunpack.c.0.s8 %v1013
  %v1015 = vlaneseq
  %v1016 = vshrl.u32 %v1015, 7
  %v1017 = vsub.s32 %v1014, %v1016
  %v1018 = vrot.slane %v1010, %v1017
  %1019 = vrot.lane.b32.xlu0 %v1018, 72
  %v1020 = vpop.permute.xlu0 %1019
  %v1022 = vadd.f32 %v565, %v1020
  %v1023 = vmul.f32 %v1022, 0.04
  %1024 = vst.msk [vmem:[%s2 + $0xe] sm:$0x3] %vm804, %v1023
  %1025 = vrot.lane.b32.xlu0 %v11, 56
  %v1026 = vpop.permute.xlu0 %1025
  %v1027 = vrot.slane %v1026, 6
  %v1031 = vunpack.c.l.s4 1983009808
  %v1032 = vunpack.c.0.s8 %v1031
  %v1033 = vlaneseq
  %v1034 = vshrl.u32 %v1033, 7
  %v1035 = vsub.s32 %v1032, %v1034
  %v1036 = vrot.slane %v1023, %v1035
  %1037 = vrot.lane.b32.xlu0 %v1036, 56
  %v1038 = vpop.permute.xlu0 %1037
  %v1040 = vsub.f32 %v1027, %v1038
  %1042 = vrot.lane.b32.xlu0 %v1040, 72
  %v1043 = vpop.permute.xlu0 %1042
  %1045 = vst.msk [vmem:[%s1 + $0xe] sm:$0x3] %vm804, %v1043
  %v1046 = vmul.f32 %v864, 7.0
  %v1049 = vunpack.c.l.s4 1983009808
  %v1050 = vunpack.c.0.s8 %v1049
  %v1051 = vlaneseq
  %v1052 = vshrl.u32 %v1051, 7
  %v1053 = vsub.s32 %v1050, %v1052
  %v1054 = vrot.slane %v1046, %v1053
  %1055 = vrot.lane.b32.xlu0 %v1054, 80
  %v1056 = vpop.permute.xlu0 %1055
  %v1058 = vadd.f32 %v565, %v1056
  %v1059 = vmul.f32 %v1058, 0.04
  %1060 = vst.msk [vmem:[%s2 + $0xe] sm:$0x3] %vm818, %v1059
  %1061 = vrot.lane.b32.xlu0 %v11, 48
  %v1062 = vpop.permute.xlu0 %1061
  %v1063 = vrot.slane %v1062, 6
  %v1067 = vunpack.c.l.s4 1983009808
  %v1068 = vunpack.c.0.s8 %v1067
  %v1069 = vlaneseq
  %v1070 = vshrl.u32 %v1069, 7
  %v1071 = vsub.s32 %v1068, %v1070
  %v1072 = vrot.slane %v1059, %v1071
  %1073 = vrot.lane.b32.xlu0 %v1072, 48
  %v1074 = vpop.permute.xlu0 %1073
  %v1076 = vsub.f32 %v1063, %v1074
  %1078 = vrot.lane.b32.xlu0 %v1076, 80
  %v1079 = vpop.permute.xlu0 %1078
  %1081 = vst.msk [vmem:[%s1 + $0xe] sm:$0x3] %vm818, %v1079
  %v1082 = vmul.f32 %v864, 8.0
  %v1085 = vunpack.c.l.s4 1983009808
  %v1086 = vunpack.c.0.s8 %v1085
  %v1087 = vlaneseq
  %v1088 = vshrl.u32 %v1087, 7
  %v1089 = vsub.s32 %v1086, %v1088
  %v1090 = vrot.slane %v1082, %v1089
  %1091 = vrot.lane.b32.xlu0 %v1090, 88
  %v1092 = vpop.permute.xlu0 %1091
  %v1094 = vadd.f32 %v565, %v1092
  %v1095 = vmul.f32 %v1094, 0.04
  %1096 = vst.msk [vmem:[%s2 + $0xe] sm:$0x3] %vm831, %v1095
  %1097 = vrot.lane.b32.xlu0 %v11, 40
  %v1098 = vpop.permute.xlu0 %1097
  %v1099 = vrot.slane %v1098, 6
  %v1103 = vunpack.c.l.s4 1983009808
  %v1104 = vunpack.c.0.s8 %v1103
  %v1105 = vlaneseq
  %v1106 = vshrl.u32 %v1105, 7
  %v1107 = vsub.s32 %v1104, %v1106
  %v1108 = vrot.slane %v1095, %v1107
  %1109 = vrot.lane.b32.xlu0 %v1108, 40
  %v1110 = vpop.permute.xlu0 %1109
  %v1112 = vsub.f32 %v1099, %v1110
  %1114 = vrot.lane.b32.xlu0 %v1112, 88
  %v1115 = vpop.permute.xlu0 %1114
  %1117 = vst.msk [vmem:[%s1 + $0xe] sm:$0x3] %vm831, %v1115
  %v1118 = vmul.f32 %v864, 9.0
  %v1121 = vunpack.c.l.s4 1983009808
  %v1122 = vunpack.c.0.s8 %v1121
  %v1123 = vlaneseq
  %v1124 = vshrl.u32 %v1123, 7
  %v1125 = vsub.s32 %v1122, %v1124
  %v1126 = vrot.slane %v1118, %v1125
  %1127 = vrot.lane.b32.xlu0 %v1126, 96
  %v1128 = vpop.permute.xlu0 %1127
  %v1130 = vadd.f32 %v565, %v1128
  %v1131 = vmul.f32 %v1130, 0.04
  %vm1132 = vcmask 845568
  %1133 = vst.msk [vmem:[%s2 + $0xe] sm:$0x3] %vm1132, %v1131
  %1134 = vrot.lane.b32.xlu0 %v11, 32
  %v1135 = vpop.permute.xlu0 %1134
  %v1136 = vrot.slane %v1135, 6
  %v1140 = vunpack.c.l.s4 1983009808
  %v1141 = vunpack.c.0.s8 %v1140
  %v1142 = vlaneseq
  %v1143 = vshrl.u32 %v1142, 7
  %v1144 = vsub.s32 %v1141, %v1143
  %v1145 = vrot.slane %v1131, %v1144
  %1146 = vrot.lane.b32.xlu0 %v1145, 32
  %v1147 = vpop.permute.xlu0 %1146
  %v1149 = vsub.f32 %v1136, %v1147
  %1151 = vrot.lane.b32.xlu0 %v1149, 96
  %v1152 = vpop.permute.xlu0 %1151
  %1154 = vst.msk [vmem:[%s1 + $0xe] sm:$0x3] %vm1132, %v1152
  %v1155 = vmul.f32 %v864, 10.0
  %v1158 = vunpack.c.l.s4 1983009808
  %v1159 = vunpack.c.0.s8 %v1158
  %v1160 = vlaneseq
  %v1161 = vshrl.u32 %v1160, 7
  %v1162 = vsub.s32 %v1159, %v1161
  %v1163 = vrot.slane %v1155, %v1162
  %1164 = vrot.lane.b32.xlu0 %v1163, 104
  %v1165 = vpop.permute.xlu0 %1164
  %v1167 = vadd.f32 %v565, %v1165
  %v1168 = vmul.f32 %v1167, 0.04
  %vm1169 = vcmask 911168
  %1170 = vst.msk [vmem:[%s2 + $0xe] sm:$0x3] %vm1169, %v1168
  %1171 = vrot.lane.b32.xlu0 %v11, 24
  %v1172 = vpop.permute.xlu0 %1171
  %v1173 = vrot.slane %v1172, 6
  %v1177 = vunpack.c.l.s4 1983009808
  %v1178 = vunpack.c.0.s8 %v1177
  %v1179 = vlaneseq
  %v1180 = vshrl.u32 %v1179, 7
  %v1181 = vsub.s32 %v1178, %v1180
  %v1182 = vrot.slane %v1168, %v1181
  %1183 = vrot.lane.b32.xlu0 %v1182, 24
  %v1184 = vpop.permute.xlu0 %1183
  %v1186 = vsub.f32 %v1173, %v1184
  %1188 = vrot.lane.b32.xlu0 %v1186, 104
  %v1189 = vpop.permute.xlu0 %1188
  %1191 = vst.msk [vmem:[%s1 + $0xe] sm:$0x3] %vm1169, %v1189
  %v1192 = vmul.f32 %v864, 11.0
  %v1195 = vunpack.c.l.s4 1983009808
  %v1196 = vunpack.c.0.s8 %v1195
  %v1197 = vlaneseq
  %v1198 = vshrl.u32 %v1197, 7
  %v1199 = vsub.s32 %v1196, %v1198
  %v1200 = vrot.slane %v1192, %v1199
  %1201 = vrot.lane.b32.xlu0 %v1200, 112
  %v1202 = vpop.permute.xlu0 %1201
  %v1204 = vadd.f32 %v565, %v1202
  %v1205 = vmul.f32 %v1204, 0.04
  %vm1206 = vcmask 976768
  %1207 = vst.msk [vmem:[%s2 + $0xe] sm:$0x3] %vm1206, %v1205
  %1208 = vrot.lane.b32.xlu0 %v11, 16
  %v1209 = vpop.permute.xlu0 %1208
  %v1210 = vrot.slane %v1209, 6
  %v1214 = vunpack.c.l.s4 1983009808
  %v1215 = vunpack.c.0.s8 %v1214
  %v1216 = vlaneseq
  %v1217 = vshrl.u32 %v1216, 7
  %v1218 = vsub.s32 %v1215, %v1217
  %v1219 = vrot.slane %v1205, %v1218
  %1220 = vrot.lane.b32.xlu0 %v1219, 16
  %v1221 = vpop.permute.xlu0 %1220
  %v1223 = vsub.f32 %v1210, %v1221
  %1225 = vrot.lane.b32.xlu0 %v1223, 112
  %v1226 = vpop.permute.xlu0 %1225
  %1228 = vst.msk [vmem:[%s1 + $0xe] sm:$0x3] %vm1206, %v1226
  %v1229 = vmul.f32 %v864, 12.0
  %v1232 = vunpack.c.l.s4 1983009808
  %v1233 = vunpack.c.0.s8 %v1232
  %v1234 = vlaneseq
  %v1235 = vshrl.u32 %v1234, 7
  %v1236 = vsub.s32 %v1233, %v1235
  %v1237 = vrot.slane %v1229, %v1236
  %1238 = vrot.lane.b32.xlu0 %v1237, 120
  %v1239 = vpop.permute.xlu0 %1238
  %v1241 = vadd.f32 %v565, %v1239
  %v1242 = vmul.f32 %v1241, 0.04
  %vm1243 = vcmask 1042368
  %1244 = vst.msk [vmem:[%s2 + $0xe] sm:$0x3] %vm1243, %v1242
  %v1247 = vunpack.c.l.s4 1983009808
  %v1248 = vunpack.c.0.s8 %v1247
  %v1249 = vlaneseq
  %v1250 = vshrl.u32 %v1249, 7
  %v1251 = vsub.s32 %v1248, %v1250
  %v1252 = vrot.slane %v1242, %v1251
  %1253 = vrot.lane.b32.xlu0 %v1252, 8
  %v1254 = vpop.permute.xlu0 %1253
  %v1256 = vsub.f32 %v864, %v1254
  %1258 = vrot.lane.b32.xlu0 %v1256, 120
  %v1259 = vpop.permute.xlu0 %1258
  %1261 = vst.msk [vmem:[%s1 + $0xe] sm:$0x3] %vm1243, %v1259
  // Predicated region
  $region6: #{series_decomp.1} parent=0 // pred_check
    _
  $region7: #{series_decomp.1} parent=0 // pred_check_branch
    %1263 = sbr.rel (0) target = $region9
  $region8: #{series_decomp.1} parent=0 // pred_region
    _
  $region9: #{series_decomp.1} parent=0 // pred_fallthru
    _
  // Predicated region
  $region10: #{series_decomp.1} parent=0 // pred_check
    _
  $region11: #{series_decomp.1} parent=0 // pred_check_branch
    %1265 = sbr.rel (0) target = $region13
  $region12: #{series_decomp.1} parent=0 // pred_region
    _
  $region13: #{series_decomp.1} parent=0 // pred_fallthru
    _
  // Predicated region
  $region14: #{series_decomp.1} parent=0 // pred_check
    _
  $region15: #{series_decomp.1} parent=0 // pred_check_branch
    %1267 = sbr.rel (0) target = $region17
  $region16: #{series_decomp.1} parent=0 // pred_region
    _
  $region17: #{series_decomp.1} parent=0 // pred_fallthru
    _
  // Predicated region
  $region18: #{series_decomp.1} parent=0 // pred_check
    _
  $region19: #{series_decomp.1} parent=0 // pred_check_branch
    %1269 = sbr.rel (0) target = $region21
  $region20: #{series_decomp.1} parent=0 // pred_region
    _
  $region21: #{series_decomp.1} parent=0 // pred_fallthru
    _

</llo_original>
